<compile_context>
chip_gen: v5e
topology: v5e:2x2
jax: 0.10.0
libtpu: 0.0.40
codegen_flags: <defaults>
</compile_context>

<pallas_src>
import functools

import jax
import jax.numpy as jnp
from jax import lax
from jax.experimental import pallas as pl
from jax.experimental.pallas import tpu as pltpu


def _round_up(a, m):
    return ((a + m - 1) // m) * m


def _num_tensorcores():
    """Best-effort TensorCores-per-device query (v7x has 2); defaults to 1."""
    try:
        dev = jax.devices()[0]
        for attr in ("num_cores", "core_count", "num_tensorcores"):
            v = getattr(dev, attr, None)
            if isinstance(v, int) and v > 0:
                return min(v, 2)
    except Exception:
        pass
    return 1


def _vmem_limit_bytes(C, C8, npad, tq):
    """Scoped-VMEM hint: X scratch + bf16 K^T/V + out tiles + eT/p headroom."""
    f32, bf16 = 4, 2
    x_s = _round_up(C, 8) * npad * f32                       # f32 X scratch
    v_s = _round_up(C, 16) * npad * bf16                     # bf16 V scratch
    kt_s = _round_up(npad, 16) * _round_up(C8, 128) * bf16   # bf16 K^T scratch
    out_io = 2 * _round_up(C, 8) * _round_up(tq, 128) * f32  # dbl-buffered out
    temps = 3 * npad * _round_up(tq, 128) * f32              # eT, p, headroom
    wts = (2 * _round_up(C8, 16) + _round_up(C, 16)) * _round_up(C, 128) * bf16
    est = int(1.5 * (x_s + v_s + kt_s + out_io + temps + wts)) + (2 << 20)
    try:
        phys = int(pltpu.get_tpu_info().vmem_capacity_bytes)
    except Exception:
        phys = 64 << 20                                      # v7x-safe fallback
    return max(32 << 20, min(est, int(phys * 0.85)))


def _pam_kernel(x_hbm_ref, wq_ref, wk_ref, wv_ref,
                bq_ref, bk_ref, bv_ref, gamma_ref,
                o_ref,
                x_s, kT_s, v_s, dma_sem,
                *, n_valid, tq, nq_per_split):
    """One (batch, query-split, query-tile) grid step.

    x_hbm_ref : (B, C, NPAD) f32 in HBM (memory_space=pl.ANY, manual DMA)
    wq_ref/wk_ref : (C8, C) bf16      wv_ref : (C, C) bf16
    bq_ref : (C8, 1) f32    bk_ref : (1, C8) f32    bv_ref : (C, 1) f32
    gamma_ref : (1,) f32 in SMEM
    o_ref  : (1, C, TQ) f32 output tile
    x_s    : (C, NPAD) f32  VMEM scratch — single (not double-buffered) copy of X
    kT_s   : (NPAD, C8) bf16 VMEM scratch — K^T
    v_s    : (C, NPAD) bf16 VMEM scratch — V
    dma_sem: DMA completion semaphore
    """
    b = pl.program_id(0)
    s = pl.program_id(1)
    q = pl.program_id(2)
    npad = x_s.shape[1]

    # ---- once per (batch, split): DMA X in, build K^T and V in bf16 --------
    @pl.when(q == 0)
    def _():
        cp = pltpu.make_async_copy(x_hbm_ref.at[b], x_s, dma_sem)
        cp.start()
        cp.wait()
        xb = x_s[...].astype(jnp.bfloat16)                        # (C, NPAD)
        # V = Wv @ X + bv   (bf16 MXU operands, f32 accumulation)
        v_s[...] = (jnp.dot(wv_ref[...], xb,
                            preferred_element_type=jnp.float32)
                    + bv_ref[...]).astype(jnp.bfloat16)
        # K^T[j, e] = sum_c X[c, j] * Wk[e, c]   (amortized over all q tiles)
        kT = lax.dot_general(xb, wk_ref[...],
                             (((0,), (1,)), ((), ())),
                             preferred_element_type=jnp.float32)
        kT_s[...] = (kT + bk_ref[...]).astype(jnp.bfloat16)

    # ---- per query tile -----------------------------------------------------
    gq = s * nq_per_split + q
    q_start = pl.multiple_of(gq * tq, tq)
    xq = x_s[:, pl.ds(q_start, tq)]                               # (C, TQ) f32
    # Q = Wq @ xq + bq     (bf16 operands, f32 accumulation + f32 bias)
    q_f32 = jnp.dot(wq_ref[...], xq.astype(jnp.bfloat16),
                    preferred_element_type=jnp.float32) + bq_ref[...]
    qb = q_f32.astype(jnp.bfloat16)                               # (C8, TQ)
    # energy^T[j, i] = sum_e K[e, j] * Q[e, i]  -> (NPAD, TQ)  (NN bf16 matmul)
    eT = jnp.dot(kT_s[...], qb, preferred_element_type=jnp.float32)

    if npad != n_valid:            # static branch: mask padded key rows
        row = lax.broadcasted_iota(jnp.int32, eT.shape, 0)
        eT = jnp.where(row < n_valid, eT, -jnp.inf)

    # softmax over keys (axis 0 of the transposed energy), f32
    m = jnp.max(eT, axis=0, keepdims=True)                        # (1, TQ)
    p = jnp.exp(eT - m)                                           # (NPAD, TQ)
    l = jnp.sum(p, axis=0, keepdims=True)                         # (1, TQ)

    # out[c, i] = (1/l_i) * sum_j V[c, j] * p[j, i]   (bf16 V@p, deep K=NPAD)
    ov = jnp.dot(v_s[...], p.astype(jnp.bfloat16),
                 preferred_element_type=jnp.float32)              # (C, TQ)
    out_t = ov * pl.reciprocal(l, approx=True)
    o_ref[0] = (gamma_ref[0] * out_t + xq).astype(o_ref.dtype)


def pam_module(x, wq, bq, wk, bk, wv, bv, gamma, *, tq=None, q_splits=None):
    """JAX/Pallas equivalent of PAM_Module.forward (returns `out` only).

    x     : (B, C, H, W) float32 (NCHW)
    wq,wk : (C//8, C, 1, 1)   bq, bk : (C//8,)
    wv    : (C, C, 1, 1)      bv     : (C,)
    gamma : scalar
    q_splits: optional 2 on v7x with small batch (one query half per core).
    """
    B, C, H, W = x.shape
    assert C % 8 == 0, "in_dim must be divisible by 8 (module uses in_dim // 8)"
    C8 = C // 8
    N = H * W
    NPAD = _round_up(N, 128)

    if tq is None:
        # 256 fills the 256-wide v6e/v7x MXU; fall back to 128 otherwise.
        tq = 256 if NPAD % 256 == 0 else 128
    TQ = min(tq, NPAD)
    if NPAD % TQ != 0:
        TQ = 128
    NQ = NPAD // TQ

    if q_splits is None:
        q_splits = 2 if (B == 1 and NQ >= 2 and NQ % 2 == 0
                         and _num_tensorcores() >= 2) else 1
    QS = q_splits if (q_splits >= 1 and NQ % q_splits == 0) else 1
    NQS = NQ // QS

    x3 = x.reshape(B, C, N).astype(jnp.float32)
    if NPAD != N:
        x3 = jnp.pad(x3, ((0, 0), (0, 0), (0, NPAD - N)))

    wq2 = jnp.reshape(wq, (C8, C)).astype(jnp.bfloat16)
    wk2 = jnp.reshape(wk, (C8, C)).astype(jnp.bfloat16)
    wv2 = jnp.reshape(wv, (C, C)).astype(jnp.bfloat16)
    bq2 = jnp.reshape(bq, (C8, 1)).astype(jnp.float32)
    bk2 = jnp.reshape(bk, (1, C8)).astype(jnp.float32)
    bv2 = jnp.reshape(bv, (C, 1)).astype(jnp.float32)
    g = jnp.reshape(jnp.asarray(gamma, jnp.float32), (1,))

    kernel = functools.partial(_pam_kernel, n_valid=N, tq=TQ, nq_per_split=NQS)

    out3 = pl.pallas_call(
        kernel,
        out_shape=jax.ShapeDtypeStruct((B, C, NPAD), jnp.float32),
        grid_spec=pltpu.PrefetchScalarGridSpec(
            num_scalar_prefetch=0,
            grid=(B, QS, NQS),
            in_specs=[
                pl.BlockSpec(memory_space=pl.ANY),              # X stays in HBM
                pl.BlockSpec((C8, C), lambda b, s, q: (0, 0)),  # Wq (bf16)
                pl.BlockSpec((C8, C), lambda b, s, q: (0, 0)),  # Wk (bf16)
                pl.BlockSpec((C, C), lambda b, s, q: (0, 0)),   # Wv (bf16)
                pl.BlockSpec((C8, 1), lambda b, s, q: (0, 0)),  # bq
                pl.BlockSpec((1, C8), lambda b, s, q: (0, 0)),  # bk
                pl.BlockSpec((C, 1), lambda b, s, q: (0, 0)),   # bv
                pl.BlockSpec(memory_space=pltpu.MemorySpace.SMEM),  # gamma
            ],
            out_specs=pl.BlockSpec((1, C, TQ),
                                   lambda b, s, q: (b, 0, s * NQS + q)),
            scratch_shapes=[
                pltpu.VMEM((C, NPAD), jnp.float32),    # X (single copy, f32)
                pltpu.VMEM((NPAD, C8), jnp.bfloat16),  # K^T
                pltpu.VMEM((C, NPAD), jnp.bfloat16),   # V
                pltpu.SemaphoreType.DMA,               # X DMA semaphore
            ],
        ),
        compiler_params=pltpu.CompilerParams(
            dimension_semantics=("parallel", "parallel", "arbitrary"),
            vmem_limit_bytes=_vmem_limit_bytes(C, C8, NPAD, TQ)),
    )(x3, wq2, wk2, wv2, bq2, bk2, bv2, g)

    if NPAD != N:
        out3 = out3[:, :, :N]
    return out3.reshape(B, C, H, W)


# ----------------------------- reference ------------------------------------
def _pam_reference(x, wq, bq, wk, bk, wv, bv, gamma, *, mimic_bf16):
    """Pure-JAX PAM forward. mimic_bf16=True reproduces the kernel's casts."""
    B, C, H, W = x.shape
    C8 = C // 8
    N = H * W
    X = x.reshape(B, C, N).astype(jnp.float32)
    wq2 = wq.reshape(C8, C)
    wk2 = wk.reshape(C8, C)
    wv2 = wv.reshape(C, C)
    if mimic_bf16:
        Xm = X.astype(jnp.bfloat16)
        wq2, wk2, wv2 = (w.astype(jnp.bfloat16) for w in (wq2, wk2, wv2))
    else:
        Xm = X
    Q = jnp.einsum("oc,bcn->bon", wq2, Xm,
                   preferred_element_type=jnp.float32) + bq[None, :, None]
    K = jnp.einsum("oc,bcn->bon", wk2, Xm,
                   preferred_element_type=jnp.float32) + bk[None, :, None]
    V = jnp.einsum("oc,bcn->bon", wv2, Xm,
                   preferred_element_type=jnp.float32) + bv[None, :, None]
    if mimic_bf16:
        Q, K, V = (t.astype(jnp.bfloat16) for t in (Q, K, V))
    energy = jnp.einsum("bci,bcj->bij", Q, K,
                        preferred_element_type=jnp.float32)       # (B, N, N)
    m = jnp.max(energy, axis=-1, keepdims=True)
    p = jnp.exp(energy - m)
    l = jnp.sum(p, axis=-1, keepdims=True)                        # (B, N, 1)
    if mimic_bf16:
        p = p.astype(jnp.bfloat16)
    out = jnp.einsum("bcj,bij->bci", V, p,
                     preferred_element_type=jnp.float32)          # (B, C, N)
    out = out / jnp.swapaxes(l, 1, 2)
    out = gamma * out + X
    return out.reshape(B, C, H, W)


if __name__ == "__main__":
    key = jax.random.PRNGKey(0)

    def make_params(k, C):
        C8 = C // 8
        ks = jax.random.split(k, 6)
        wq = 0.1 * jax.random.normal(ks[0], (C8, C, 1, 1), jnp.float32)
        bq = 0.1 * jax.random.normal(ks[1], (C8,), jnp.float32)
        wk = 0.1 * jax.random.normal(ks[2], (C8, C, 1, 1), jnp.float32)
        bk = 0.1 * jax.random.normal(ks[3], (C8,), jnp.float32)
        wv = 0.1 * jax.random.normal(ks[4], (C, C, 1, 1), jnp.float32)
        bv = 0.1 * jax.random.normal(ks[5], (C,), jnp.float32)
        return wq, bq, wk, bk, wv, bv

    # gamma=0 in the module init makes out == x; use nonzero to exercise attn.
    gamma = jnp.float32(0.7)

    configs = [
        dict(B=2, C=32, H=16, W=32, q_splits=None),  # N=512 -> TQ=256, 2 tiles
        dict(B=1, C=32, H=10, W=12, q_splits=None),  # N=120 -> padded to 128
        dict(B=1, C=32, H=16, W=32, q_splits=2),     # explicit 2-way q split
    ]

    for i, cfg in enumerate(configs):
        B, C, H, W = cfg["B"], cfg["C"], cfg["H"], cfg["W"]
        kx, kp, key = jax.random.split(key, 3)
        x = jax.random.normal(kx, (B, C, H, W), dtype=jnp.float32)
        wq, bq, wk, bk, wv, bv = make_params(kp, C)

        out = pam_module(x, wq, bq, wk, bk, wv, bv, gamma,
                         q_splits=cfg["q_splits"])
        out = jax.block_until_ready(out)
        assert out.shape == (B, C, H, W), (i, out.shape)

        # Tight check against a reference with the same bf16 quantization.
        ref_bf = _pam_reference(x, wq, bq, wk, bk, wv, bv, gamma,
                                mimic_bf16=True)
        err_bf = float(jnp.max(jnp.abs(out - ref_bf)))
        assert err_bf < 1e-2, f"config {i}: bf16-matched mismatch {err_bf}"

        # Loose sanity check against the pure-f32 reference (bf16 MXU inputs).
        ref_f32 = _pam_reference(x, wq, bq, wk, bk, wv, bv, gamma,
                                 mimic_bf16=False)
        err_f32 = float(jnp.max(jnp.abs(out - ref_f32)))
        assert err_f32 < 1.2e-1, f"config {i}: f32 sanity mismatch {err_f32}"

    print("KERNEL_OK")
</pallas_src>

<mosaic_0001>
module attributes {stable_mosaic.version = 11 : i64} {
  func.func @_pam_kernel(%arg0: i32, %arg1: i32, %arg2: i32, %arg3: memref<2x32x512xf32, #tpu.memory_space<any>>, %arg4: memref<4x32xbf16, #tpu.memory_space<vmem>>, %arg5: memref<4x32xbf16, #tpu.memory_space<vmem>>, %arg6: memref<32x32xbf16, #tpu.memory_space<vmem>>, %arg7: memref<4x1xf32, #tpu.memory_space<vmem>>, %arg8: memref<1x4xf32, #tpu.memory_space<vmem>>, %arg9: memref<32x1xf32, #tpu.memory_space<vmem>>, %arg10: memref<1xf32, #tpu.memory_space<smem>>, %arg11: memref<1x32x256xf32, #tpu.memory_space<vmem>>, %arg12: memref<32x512xf32, #tpu.memory_space<vmem>>, %arg13: memref<512x4xbf16, #tpu.memory_space<vmem>>, %arg14: memref<32x512xbf16, #tpu.memory_space<vmem>>, %arg15: memref<!tpu.dma_semaphore, #tpu.memory_space<semaphore_mem>>) attributes {dimension_semantics = [#tpu.dimension_semantics<parallel>, #tpu.dimension_semantics<parallel>, #tpu.dimension_semantics<arbitrary>], iteration_bounds = array<i64: 2, 1, 2>, scalar_prefetch = 0 : i64, scratch_operands = 4 : i64, tpu.core_type = #tpu.core_type<tc>, window_params = [{}, {pipeline_mode = #tpu.pipeline_mode<synchronous>, transform_indices = @transform_1, window_bounds = array<i64: 4, 32>}, {pipeline_mode = #tpu.pipeline_mode<synchronous>, transform_indices = @transform_2, window_bounds = array<i64: 4, 32>}, {pipeline_mode = #tpu.pipeline_mode<synchronous>, transform_indices = @transform_3, window_bounds = array<i64: 32, 32>}, {pipeline_mode = #tpu.pipeline_mode<synchronous>, transform_indices = @transform_4, window_bounds = array<i64: 4, 1>}, {pipeline_mode = #tpu.pipeline_mode<synchronous>, transform_indices = @transform_5, window_bounds = array<i64: 1, 4>}, {pipeline_mode = #tpu.pipeline_mode<synchronous>, transform_indices = @transform_6, window_bounds = array<i64: 32, 1>}, {transform_indices = @transform_7, window_bounds = array<i64: 1>}, {transform_indices = @transform_8, window_bounds = array<i64: 1, 32, 256>}]} {
    %c0_i32 = arith.constant 0 : i32
    %0 = arith.cmpi eq, %arg2, %c0_i32 : i32
    %1 = arith.extui %0 : i1 to i32
    %c0_i32_0 = arith.constant 0 : i32
    %2 = arith.cmpi ne, %1, %c0_i32_0 : i32
    scf.if %2 {
      %c0_i32_17 = arith.constant 0 : i32
      %c0_i32_18 = arith.constant 0 : i32
      %38 = tpu.memref_slice %arg3[%arg0, %c0_i32_17, %c0_i32_18] : memref<2x32x512xf32, #tpu.memory_space<any>> -> memref<1x32x512xf32, #tpu.memory_space<any>>
      %39 = tpu.memref_squeeze %38 : memref<1x32x512xf32, #tpu.memory_space<any>> -> memref<32x512xf32, #tpu.memory_space<any>>
      tpu.enqueue_dma source(%39 : memref<32x512xf32, #tpu.memory_space<any>>) target(%arg12 : memref<32x512xf32, #tpu.memory_space<vmem>>) target_semaphore(%arg15 : memref<!tpu.dma_semaphore, #tpu.memory_space<semaphore_mem>>)
      %c0_i32_19 = arith.constant 0 : i32
      %c0_i32_20 = arith.constant 0 : i32
      %40 = tpu.memref_slice %arg3[%arg0, %c0_i32_19, %c0_i32_20] : memref<2x32x512xf32, #tpu.memory_space<any>> -> memref<1x32x512xf32, #tpu.memory_space<any>>
      %41 = tpu.memref_squeeze %40 : memref<1x32x512xf32, #tpu.memory_space<any>> -> memref<32x512xf32, #tpu.memory_space<any>>
      tpu.wait_dma2 semaphore(%arg15 : memref<!tpu.dma_semaphore, #tpu.memory_space<semaphore_mem>>) src(%41 : memref<32x512xf32, #tpu.memory_space<any>>) dst(%arg12 : memref<32x512xf32, #tpu.memory_space<vmem>>)
      %c0_21 = arith.constant 0 : index
      %c0_22 = arith.constant 0 : index
      %42 = vector.load %arg12[%c0_21, %c0_22] : memref<32x512xf32, #tpu.memory_space<vmem>>, vector<32x512xf32>
      %43 = arith.truncf %42 : vector<32x512xf32> to vector<32x512xbf16>
      %c0_23 = arith.constant 0 : index
      %c0_24 = arith.constant 0 : index
      %44 = vector.load %arg6[%c0_23, %c0_24] : memref<32x32xbf16, #tpu.memory_space<vmem>>, vector<32x32xbf16>
      %cst_25 = arith.constant dense<0.000000e+00> : vector<32x512xf32>
      %45 = tpu.matmul %44, %43, %cst_25 {dimension_numbers = #tpu.dot_dimension_numbers<[1], [0], [0], [1], [0, 0, 1, 1], [], []>} : vector<32x32xbf16>, vector<32x512xbf16>, vector<32x512xf32> -> vector<32x512xf32>
      %c0_26 = arith.constant 0 : index
      %c0_27 = arith.constant 0 : index
      %46 = vector.load %arg9[%c0_26, %c0_27] : memref<32x1xf32, #tpu.memory_space<vmem>>, vector<32x1xf32>
      %47 = vector.broadcast %46 : vector<32x1xf32> to vector<32x512xf32>
      %48 = arith.addf %45, %47 : vector<32x512xf32>
      %49 = arith.truncf %48 : vector<32x512xf32> to vector<32x512xbf16>
      %c0_28 = arith.constant 0 : index
      %c0_29 = arith.constant 0 : index
      %50 = vector.load %arg14[%c0_28, %c0_29] : memref<32x512xbf16, #tpu.memory_space<vmem>>, vector<32x512xbf16>
      tpu.vector_store %arg14[%c0_28, %c0_29], %49 {strides = array<i32>} : memref<32x512xbf16, #tpu.memory_space<vmem>>, vector<32x512xbf16>,
      %c0_30 = arith.constant 0 : index
      %c0_31 = arith.constant 0 : index
      %51 = vector.load %arg5[%c0_30, %c0_31] : memref<4x32xbf16, #tpu.memory_space<vmem>>, vector<4x32xbf16>
      %cst_32 = arith.constant dense<0.000000e+00> : vector<512x4xf32>
      %52 = tpu.matmul %43, %51, %cst_32 {dimension_numbers = #tpu.dot_dimension_numbers<[0], [1], [1], [0], [0, 1, 1, 0], [], []>} : vector<32x512xbf16>, vector<4x32xbf16>, vector<512x4xf32> -> vector<512x4xf32>
      %c0_33 = arith.constant 0 : index
      %c0_34 = arith.constant 0 : index
      %53 = vector.load %arg8[%c0_33, %c0_34] : memref<1x4xf32, #tpu.memory_space<vmem>>, vector<1x4xf32>
      %54 = vector.broadcast %53 : vector<1x4xf32> to vector<512x4xf32>
      %55 = arith.addf %52, %54 : vector<512x4xf32>
      %56 = arith.truncf %55 : vector<512x4xf32> to vector<512x4xbf16>
      %c0_35 = arith.constant 0 : index
      %c0_36 = arith.constant 0 : index
      %57 = vector.load %arg13[%c0_35, %c0_36] : memref<512x4xbf16, #tpu.memory_space<vmem>>, vector<512x4xbf16>
      tpu.vector_store %arg13[%c0_35, %c0_36], %56 {strides = array<i32>} : memref<512x4xbf16, #tpu.memory_space<vmem>>, vector<512x4xbf16>,
    } else {
    }
    %c2_i32 = arith.constant 2 : i32
    %3 = arith.muli %arg1, %c2_i32 : i32
    %4 = arith.addi %3, %arg2 : i32
    %c256_i32 = arith.constant 256 : i32
    %5 = arith.muli %4, %c256_i32 : i32
    %6 = tpu.assume_multiple %5, 256 : i32
    %c0 = arith.constant 0 : index
    %7 = arith.index_cast %6 : i32 to index
    %8 = vector.load %arg12[%c0, %7] : memref<32x512xf32, #tpu.memory_space<vmem>>, vector<32x256xf32>
    %c0_1 = arith.constant 0 : index
    %c0_2 = arith.constant 0 : index
    %9 = vector.load %arg4[%c0_1, %c0_2] : memref<4x32xbf16, #tpu.memory_space<vmem>>, vector<4x32xbf16>
    %10 = arith.truncf %8 : vector<32x256xf32> to vector<32x256xbf16>
    %cst = arith.constant dense<0.000000e+00> : vector<4x256xf32>
    %11 = tpu.matmul %9, %10, %cst {dimension_numbers = #tpu.dot_dimension_numbers<[1], [0], [0], [1], [0, 0, 1, 1], [], []>} : vector<4x32xbf16>, vector<32x256xbf16>, vector<4x256xf32> -> vector<4x256xf32>
    %c0_3 = arith.constant 0 : index
    %c0_4 = arith.constant 0 : index
    %12 = vector.load %arg7[%c0_3, %c0_4] : memref<4x1xf32, #tpu.memory_space<vmem>>, vector<4x1xf32>
    %13 = vector.broadcast %12 : vector<4x1xf32> to vector<4x256xf32>
    %14 = arith.addf %11, %13 : vector<4x256xf32>
    %15 = arith.truncf %14 : vector<4x256xf32> to vector<4x256xbf16>
    %c0_5 = arith.constant 0 : index
    %c0_6 = arith.constant 0 : index
    %16 = vector.load %arg13[%c0_5, %c0_6] : memref<512x4xbf16, #tpu.memory_space<vmem>>, vector<512x4xbf16>
    %cst_7 = arith.constant dense<0.000000e+00> : vector<512x256xf32>
    %17 = tpu.matmul %16, %15, %cst_7 {dimension_numbers = #tpu.dot_dimension_numbers<[1], [0], [0], [1], [0, 0, 1, 1], [], []>} : vector<512x4xbf16>, vector<4x256xbf16>, vector<512x256xf32> -> vector<512x256xf32>
    %cst_8 = arith.constant dense<0xFF800000> : vector<256xf32>
    %18 = vector.multi_reduction <maximumf>, %17, %cst_8 [0] : vector<512x256xf32> to vector<256xf32>
    %19 = vector.shape_cast %18 : vector<256xf32> to vector<1x256xf32>
    %20 = vector.broadcast %19 : vector<1x256xf32> to vector<512x256xf32>
    %21 = arith.subf %17, %20 : vector<512x256xf32>
    %22 = math.exp %21 : vector<512x256xf32>
    %cst_9 = arith.constant dense<0.000000e+00> : vector<256xf32>
    %23 = vector.multi_reduction <add>, %22, %cst_9 [0] : vector<512x256xf32> to vector<256xf32>
    %24 = vector.shape_cast %23 : vector<256xf32> to vector<1x256xf32>
    %c0_10 = arith.constant 0 : index
    %c0_11 = arith.constant 0 : index
    %25 = vector.load %arg14[%c0_10, %c0_11] : memref<32x512xbf16, #tpu.memory_space<vmem>>, vector<32x512xbf16>
    %26 = arith.truncf %22 : vector<512x256xf32> to vector<512x256xbf16>
    %cst_12 = arith.constant dense<0.000000e+00> : vector<32x256xf32>
    %27 = tpu.matmul %25, %26, %cst_12 {dimension_numbers = #tpu.dot_dimension_numbers<[1], [0], [0], [1], [0, 0, 1, 1], [], []>} : vector<32x512xbf16>, vector<512x256xbf16>, vector<32x256xf32> -> vector<32x256xf32>
    %28 = tpu.reciprocal %24 {approx = true} : vector<1x256xf32> -> vector<1x256xf32>
    %29 = vector.broadcast %28 : vector<1x256xf32> to vector<32x256xf32>
    %30 = arith.mulf %27, %29 : vector<32x256xf32>
    %c0_13 = arith.constant 0 : index
    %31 = memref.load %arg10[%c0_13] : memref<1xf32, #tpu.memory_space<smem>>
    %32 = vector.broadcast %31 : f32 to vector<32x256xf32>
    %33 = arith.mulf %32, %30 : vector<32x256xf32>
    %34 = arith.addf %33, %8 : vector<32x256xf32>
    %c0_14 = arith.constant 0 : index
    %c0_15 = arith.constant 0 : index
    %c0_16 = arith.constant 0 : index
    %35 = vector.load %arg11[%c0_14, %c0_15, %c0_16] : memref<1x32x256xf32, #tpu.memory_space<vmem>>, vector<1x32x256xf32>
    %36 = vector.shape_cast %35 : vector<1x32x256xf32> to vector<32x256xf32>
    %37 = vector.shape_cast %34 : vector<32x256xf32> to vector<1x32x256xf32>
    tpu.vector_store %arg11[%c0_14, %c0_15, %c0_16], %37 {strides = array<i32>} : memref<1x32x256xf32, #tpu.memory_space<vmem>>, vector<1x32x256xf32>,
    return
  }
  func.func @transform_1(%arg0: i32, %arg1: i32, %arg2: i32) -> (i32, i32) {
    %c0_i32 = arith.constant 0 : i32
    %c0_i32_0 = arith.constant 0 : i32
    %c0_i32_1 = arith.constant 0 : i32
    return %c0_i32, %c0_i32_0 : i32, i32
  }
  func.func @transform_2(%arg0: i32, %arg1: i32, %arg2: i32) -> (i32, i32) {
    %c0_i32 = arith.constant 0 : i32
    %c0_i32_0 = arith.constant 0 : i32
    %c0_i32_1 = arith.constant 0 : i32
    return %c0_i32, %c0_i32_0 : i32, i32
  }
  func.func @transform_3(%arg0: i32, %arg1: i32, %arg2: i32) -> (i32, i32) {
    %c0_i32 = arith.constant 0 : i32
    %c0_i32_0 = arith.constant 0 : i32
    %c0_i32_1 = arith.constant 0 : i32
    return %c0_i32, %c0_i32_0 : i32, i32
  }
  func.func @transform_4(%arg0: i32, %arg1: i32, %arg2: i32) -> (i32, i32) {
    %c0_i32 = arith.constant 0 : i32
    %c0_i32_0 = arith.constant 0 : i32
    %c0_i32_1 = arith.constant 0 : i32
    return %c0_i32, %c0_i32_0 : i32, i32
  }
  func.func @transform_5(%arg0: i32, %arg1: i32, %arg2: i32) -> (i32, i32) {
    %c0_i32 = arith.constant 0 : i32
    %c0_i32_0 = arith.constant 0 : i32
    %c0_i32_1 = arith.constant 0 : i32
    return %c0_i32, %c0_i32_0 : i32, i32
  }
  func.func @transform_6(%arg0: i32, %arg1: i32, %arg2: i32) -> (i32, i32) {
    %c0_i32 = arith.constant 0 : i32
    %c0_i32_0 = arith.constant 0 : i32
    %c0_i32_1 = arith.constant 0 : i32
    return %c0_i32, %c0_i32_0 : i32, i32
  }
  func.func @transform_7(%arg0: i32, %arg1: i32, %arg2: i32) -> i32 {
    %c0_i32 = arith.constant 0 : i32
    %c0_i32_0 = arith.constant 0 : i32
    return %c0_i32 : i32
  }
  func.func @transform_8(%arg0: i32, %arg1: i32, %arg2: i32) -> (i32, i32, i32) {
    %c2_i32 = arith.constant 2 : i32
    %0 = arith.muli %arg1, %c2_i32 : i32
    %1 = arith.addi %0, %arg2 : i32
    %c0_i32 = arith.constant 0 : i32
    %c0_i32_0 = arith.constant 0 : i32
    return %arg0, %c0_i32, %1 : i32, i32, i32
  }
}

</mosaic_0001>

<llo_original>
// kernel: tpu_custom_call.1
$region0: #{tpu_custom_call.1}
  #allocation0 [shape = 'u32[]', space=smem, size = 0x4, offset = 0x4, fixed_abs, tag = 'smem constant byte address 0x4 - core index']
  #allocation1 [shape = 'u32[72,128]{1,0:T(1,128)}', space=vmem, size = 0x9000, scoped, tag = 'internal scratch']
  #allocation2 [shape = 'f32[32,512]{1,0:T(8,128)}', space=vmem, size = 0x10000, scoped, tag = 'scratch operand']
  #allocation3 [shape = 'bf16[512,4]{1,0:T(8,128)(2,1)}', space=vmem, size = 0x20000, scoped, tag = 'scratch operand']
  #allocation4 [shape = 'bf16[32,512]{1,0:T(8,128)(2,1)}', space=vmem, size = 0x8000, scoped, tag = 'scratch operand']
  #allocation5 [shape = 's32[1]{0}', space=sflag, size = 0x4, scoped, tag = 'scratch operand']
  #allocation6 [shape = 'f32[1]{0:T(128)S(6)}', space=smem, size = 0x200, scoped, tag = 'scoped memory for tpu_custom_call.1']
  #allocation9 [shape = 's32[]', space=sflag, size = 0x4, offset = 0, fixed_abs, tag = 'sflag constant byte address 0x0 - dummy sync flag']
  #allocation10 [shape = 's32[]', space=sflag, size = 0x4, offset = 0, fixed_abs, tag = 'sflag constant byte address 0x0 - dummy sync flag']
  #allocation11 [shape = 'u32[]', space=smem, size = 0x4, offset = 0x44, fixed_abs, tag = 'smem constant byte address 0x44 - assertion arg 0']
  #allocation12 [shape = 'u32[]', space=smem, size = 0x4, offset = 0x48, fixed_abs, tag = 'smem constant byte address 0x48 - assertion arg 1']
  %s0 = inlined_call_operand.hbm [shape: f32[2,32,512], index: 0, kind: input, shape index: {}]
  %s1 = inlined_call_operand.vmem [shape: bf16[4,32], index: 1, kind: input, shape index: {}]
  %s2 = inlined_call_operand.vmem [shape: bf16[4,32], index: 2, kind: input, shape index: {}]
  %s3 = inlined_call_operand.vmem [shape: bf16[32,32], index: 3, kind: input, shape index: {}]
  %s4 = inlined_call_operand.vmem [shape: f32[4,1], index: 4, kind: input, shape index: {}]
  %s5 = inlined_call_operand.vmem [shape: f32[1,4], index: 5, kind: input, shape index: {}]
  %s6 = inlined_call_operand.vmem [shape: f32[32,1], index: 6, kind: input, shape index: {}]
  %s7 = inlined_call_operand.<no memory space> [shape: f32[1], index: 7, kind: input, shape index: {}]
  %s8 = inlined_call_operand.hbm [shape: f32[2,32,512], index: 8, kind: output, shape index: {}]
  %s9 = sld [smem:[#allocation0]]
  $region69: #{tpu_custom_call.1} parent=0
    _
  %s11 = ssub.s32 1, %s9
  %s12 = scalar_select 0, %s11, %s9
  %13 = sst [smem:[#allocation6]] %s7
  $region1: #{tpu_custom_call.1} parent=0
    #allocation7 [shape = 'u8[65536]{0}', space=vmem, size = 0x10000, scoped, tag = 'output window, operand 0']
    #allocation8 [shape = 's32[2]{0}', space=sflag, size = 0x8, scoped, tag = 'scoped memory for tpu_custom_call.1']
    %14 = vsyncpa [#allocation8], 0
    %s15 = scalar_lea.sflag [#allocation8], 1
    %16 = vsyncpa %s15, 0
    loop: start=0, step=1, limit=6
    $region2: #{tpu_custom_call.1} parent=1 // loop_pre_header
      _
    $region3: #{tpu_custom_call.1} parent=1 // loop_header
      %s18 = sphi 0, %s22
      %p19 = scmp.ge.s32.totalorder %s18, 6
      %s25 = sphi 0, %s44
      %s26 = sphi 0, %s40
      %s27 = sphi 0, %s36
      %s28 = sphi 0, %s25
      %s29 = sphi 0, %s26
      %s30 = sphi 0, %s27
      %s31 = sphi 0, %s28
      %s32 = sphi 0, %s29
      %s33 = sphi 0, %s30
      %s45 = sphi 0, %s45
      %s47 = sphi 0, %s45
      %s48 = sphi 0, %s47
      %s62 = sphi 0, %s48
      %s66 = sphi 0, %s66
      %s68 = sphi 0, %s66
      %s69 = sphi 0, %s68
      %s83 = sphi 0, %s69
      %s87 = sphi 0, %s87
      %s89 = sphi 0, %s87
      %s90 = sphi 0, %s89
      %s104 = sphi 0, %s90
      %s108 = sphi 0, %s108
      %s110 = sphi 0, %s108
      %s111 = sphi 0, %s110
      %s125 = sphi 0, %s111
      %s129 = sphi 0, %s129
      %s131 = sphi 0, %s129
      %s132 = sphi 0, %s131
      %s146 = sphi 0, %s132
      %s150 = sphi 0, %s150
      %s152 = sphi 0, %s150
      %s153 = sphi 0, %s152
      %s167 = sphi 0, %s153
      %s171 = sphi 0, %s171
      %s173 = sphi 0, %s171
      %s174 = sphi 0, %s173
      %s188 = sphi 0, %s174
      %s200 = sphi 0, %s202
      %s203 = sphi 0, %s200
      %s204 = sphi 0, %s203
      %s220 = sphi 0, %s204
    $region4: #{tpu_custom_call.1} parent=1 // loop_header_branch
      %21 = sbr.rel (%p19) target = $region8
    $region5: #{tpu_custom_call.1} parent=1 // loop_body
      %s23 = ssub.s32 %s18, 1
      %s24 = ssub.s32 %s18, 2
      %s34 = sadd.s32 1, %s27
      %p35 = scmp.ge.s32.totalorder %s34, 2
      %s36 = scalar_select %p35, 0, %s34
      %s37 = sadd.s32 1, %s26
      %s38 = scalar_select %p35, %s37, %s26
      %p39 = scmp.ge.s32.totalorder %s38, 1
      %s40 = scalar_select %p39, 0, %s38
      %s41 = sadd.s32 1, %s25
      %s42 = scalar_select %p39, %s41, %s25
      %p43 = scmp.ge.s32.totalorder %s42, 2
      %s44 = scalar_select %p43, 0, %s42
      %s46 = sadd.s32 %s45, 1
      %p49 = scmp.eq.s32.totalorder %s18, 3
      %p50 = scmp.ne.s32.totalorder %s45, %s47
      %p51 = scmp.eq.s32.totalorder %s18, 0
      %p52 = por %p50, %p51
      %p53 = scmp.ne.s32.totalorder %s45, %s47
      %p54 = scmp.eq.s32.totalorder %s23, 3
      %p55 = por %p53, %p54
      %p56 = scmp.ne.s32.totalorder %s47, %s48
      %p57 = scmp.eq.s32.totalorder %s23, 0
      %p58 = por %p56, %p57
      %p59 = scmp.ne.s32.totalorder %s47, %s48
      %p60 = scmp.eq.s32.totalorder %s24, 3
      %p61 = por %p59, %p60
      %p63 = scmp.ne.s32.totalorder %s48, %s62
      %p64 = scmp.eq.s32.totalorder %s24, 0
      %p65 = por %p63, %p64
      %s67 = sadd.s32 %s66, 1
      %p70 = scmp.eq.s32.totalorder %s18, 3
      %p71 = scmp.ne.s32.totalorder %s66, %s68
      %p72 = scmp.eq.s32.totalorder %s18, 0
      %p73 = por %p71, %p72
      %p74 = scmp.ne.s32.totalorder %s66, %s68
      %p75 = scmp.eq.s32.totalorder %s23, 3
      %p76 = por %p74, %p75
      %p77 = scmp.ne.s32.totalorder %s68, %s69
      %p78 = scmp.eq.s32.totalorder %s23, 0
      %p79 = por %p77, %p78
      %p80 = scmp.ne.s32.totalorder %s68, %s69
      %p81 = scmp.eq.s32.totalorder %s24, 3
      %p82 = por %p80, %p81
      %p84 = scmp.ne.s32.totalorder %s69, %s83
      %p85 = scmp.eq.s32.totalorder %s24, 0
      %p86 = por %p84, %p85
      %s88 = sadd.s32 %s87, 1
      %p91 = scmp.eq.s32.totalorder %s18, 3
      %p92 = scmp.ne.s32.totalorder %s87, %s89
      %p93 = scmp.eq.s32.totalorder %s18, 0
      %p94 = por %p92, %p93
      %p95 = scmp.ne.s32.totalorder %s87, %s89
      %p96 = scmp.eq.s32.totalorder %s23, 3
      %p97 = por %p95, %p96
      %p98 = scmp.ne.s32.totalorder %s89, %s90
      %p99 = scmp.eq.s32.totalorder %s23, 0
      %p100 = por %p98, %p99
      %p101 = scmp.ne.s32.totalorder %s89, %s90
      %p102 = scmp.eq.s32.totalorder %s24, 3
      %p103 = por %p101, %p102
      %p105 = scmp.ne.s32.totalorder %s90, %s104
      %p106 = scmp.eq.s32.totalorder %s24, 0
      %p107 = por %p105, %p106
      %s109 = sadd.s32 %s108, 1
      %p112 = scmp.eq.s32.totalorder %s18, 3
      %p113 = scmp.ne.s32.totalorder %s108, %s110
      %p114 = scmp.eq.s32.totalorder %s18, 0
      %p115 = por %p113, %p114
      %p116 = scmp.ne.s32.totalorder %s108, %s110
      %p117 = scmp.eq.s32.totalorder %s23, 3
      %p118 = por %p116, %p117
      %p119 = scmp.ne.s32.totalorder %s110, %s111
      %p120 = scmp.eq.s32.totalorder %s23, 0
      %p121 = por %p119, %p120
      %p122 = scmp.ne.s32.totalorder %s110, %s111
      %p123 = scmp.eq.s32.totalorder %s24, 3
      %p124 = por %p122, %p123
      %p126 = scmp.ne.s32.totalorder %s111, %s125
      %p127 = scmp.eq.s32.totalorder %s24, 0
      %p128 = por %p126, %p127
      %s130 = sadd.s32 %s129, 1
      %p133 = scmp.eq.s32.totalorder %s18, 3
      %p134 = scmp.ne.s32.totalorder %s129, %s131
      %p135 = scmp.eq.s32.totalorder %s18, 0
      %p136 = por %p134, %p135
      %p137 = scmp.ne.s32.totalorder %s129, %s131
      %p138 = scmp.eq.s32.totalorder %s23, 3
      %p139 = por %p137, %p138
      %p140 = scmp.ne.s32.totalorder %s131, %s132
      %p141 = scmp.eq.s32.totalorder %s23, 0
      %p142 = por %p140, %p141
      %p143 = scmp.ne.s32.totalorder %s131, %s132
      %p144 = scmp.eq.s32.totalorder %s24, 3
      %p145 = por %p143, %p144
      %p147 = scmp.ne.s32.totalorder %s132, %s146
      %p148 = scmp.eq.s32.totalorder %s24, 0
      %p149 = por %p147, %p148
      %s151 = sadd.s32 %s150, 1
      %p154 = scmp.eq.s32.totalorder %s18, 3
      %p155 = scmp.ne.s32.totalorder %s150, %s152
      %p156 = scmp.eq.s32.totalorder %s18, 0
      %p157 = por %p155, %p156
      %p158 = scmp.ne.s32.totalorder %s150, %s152
      %p159 = scmp.eq.s32.totalorder %s23, 3
      %p160 = por %p158, %p159
      %p161 = scmp.ne.s32.totalorder %s152, %s153
      %p162 = scmp.eq.s32.totalorder %s23, 0
      %p163 = por %p161, %p162
      %p164 = scmp.ne.s32.totalorder %s152, %s153
      %p165 = scmp.eq.s32.totalorder %s24, 3
      %p166 = por %p164, %p165
      %p168 = scmp.ne.s32.totalorder %s153, %s167
      %p169 = scmp.eq.s32.totalorder %s24, 0
      %p170 = por %p168, %p169
      %s172 = sadd.s32 %s171, 1
      %p175 = scmp.eq.s32.totalorder %s18, 3
      %p176 = scmp.ne.s32.totalorder %s171, %s173
      %p177 = scmp.eq.s32.totalorder %s18, 0
      %p178 = por %p176, %p177
      %p179 = scmp.ne.s32.totalorder %s171, %s173
      %p180 = scmp.eq.s32.totalorder %s23, 3
      %p181 = por %p179, %p180
      %p182 = scmp.ne.s32.totalorder %s173, %s174
      %p183 = scmp.eq.s32.totalorder %s23, 0
      %p184 = por %p182, %p183
      %p185 = scmp.ne.s32.totalorder %s173, %s174
      %p186 = scmp.eq.s32.totalorder %s24, 3
      %p187 = por %p185, %p186
      %p189 = scmp.ne.s32.totalorder %s174, %s188
      %p190 = scmp.eq.s32.totalorder %s24, 0
      %p191 = por %p189, %p190
      %s192 = smul.u32 %s26, 2
      %s193 = sadd.s32 %s192, %s27
      %s194 = smul.u32 %s40, 2
      %s195 = sadd.s32 %s194, %s36
      %s196 = ssub.s32 %s25, %s44
      %s197 = ssub.s32 %s193, %s195
      %s198 = sor.u32 %s196, %s197
      %p199 = scmp.eq.s32.totalorder %s198, 0
      %s201 = sadd.s32 %s200, 1
      %s202 = scalar_select %p199, %s200, %s201
      %p205 = pneg %p199
      %p206 = scmp.eq.s32.totalorder %s18, 3
      %p207 = por %p205, %p206
      %p208 = scmp.ne.s32.totalorder %s200, %s203
      %p209 = scmp.eq.s32.totalorder %s18, 0
      %p210 = por %p208, %p209
      %p211 = scmp.ne.s32.totalorder %s200, %s203
      %p212 = scmp.eq.s32.totalorder %s23, 3
      %p213 = por %p211, %p212
      %p214 = scmp.ne.s32.totalorder %s203, %s204
      %p215 = scmp.eq.s32.totalorder %s23, 0
      %p216 = por %p214, %p215
      %p217 = scmp.ne.s32.totalorder %s203, %s204
      %p218 = scmp.eq.s32.totalorder %s24, 3
      %p219 = por %p217, %p218
      %p221 = scmp.ne.s32.totalorder %s204, %s220
      %p222 = scmp.eq.s32.totalorder %s24, 0
      %p223 = por %p221, %p222
      %p224 = scmp.le.s32.totalorder 1, %s18
      %p225 = scmp.lt.s32.totalorder %s18, 5
      %p226 = pnand %p224, %p225
      %p227 = pneg %p226
      // Predicated region
      $region9: #{tpu_custom_call.1} parent=5 // pred_check
        _
      $region10: #{tpu_custom_call.1} parent=5 // pred_check_branch
        %229 = sbr.rel (%p226) target = $region12
      $region11: #{tpu_custom_call.1} parent=5 // pred_region
        %s230 = ssub.s32 %s18, 1
        // Predicated region
        $region13: #{tpu_custom_call.1} parent=11 // pred_check
          %p231 = pneg %p58
        $region14: #{tpu_custom_call.1} parent=11 // pred_check_branch
          %233 = sbr.rel (%p231) target = $region16
        $region15: #{tpu_custom_call.1} parent=11 // pred_region
          _
        $region16: #{tpu_custom_call.1} parent=11 // pred_fallthru
          _
        // Predicated region
        $region17: #{tpu_custom_call.1} parent=11 // pred_check
          %p234 = pneg %p79
        $region18: #{tpu_custom_call.1} parent=11 // pred_check_branch
          %236 = sbr.rel (%p234) target = $region20
        $region19: #{tpu_custom_call.1} parent=11 // pred_region
          _
        $region20: #{tpu_custom_call.1} parent=11 // pred_fallthru
          _
        // Predicated region
        $region21: #{tpu_custom_call.1} parent=11 // pred_check
          %p237 = pneg %p100
        $region22: #{tpu_custom_call.1} parent=11 // pred_check_branch
          %239 = sbr.rel (%p237) target = $region24
        $region23: #{tpu_custom_call.1} parent=11 // pred_region
          _
        $region24: #{tpu_custom_call.1} parent=11 // pred_fallthru
          _
        // Predicated region
        $region25: #{tpu_custom_call.1} parent=11 // pred_check
          %p240 = pneg %p121
        $region26: #{tpu_custom_call.1} parent=11 // pred_check_branch
          %242 = sbr.rel (%p240) target = $region28
        $region27: #{tpu_custom_call.1} parent=11 // pred_region
          _
        $region28: #{tpu_custom_call.1} parent=11 // pred_fallthru
          _
        // Predicated region
        $region29: #{tpu_custom_call.1} parent=11 // pred_check
          %p243 = pneg %p142
        $region30: #{tpu_custom_call.1} parent=11 // pred_check_branch
          %245 = sbr.rel (%p243) target = $region32
        $region31: #{tpu_custom_call.1} parent=11 // pred_region
          _
        $region32: #{tpu_custom_call.1} parent=11 // pred_fallthru
          _
        // Predicated region
        $region33: #{tpu_custom_call.1} parent=11 // pred_check
          %p246 = pneg %p163
        $region34: #{tpu_custom_call.1} parent=11 // pred_check_branch
          %248 = sbr.rel (%p246) target = $region36
        $region35: #{tpu_custom_call.1} parent=11 // pred_region
          _
        $region36: #{tpu_custom_call.1} parent=11 // pred_fallthru
          _
        // Predicated region
        $region37: #{tpu_custom_call.1} parent=11 // pred_check
          %p249 = pneg %p184
        $region38: #{tpu_custom_call.1} parent=11 // pred_check_branch
          %251 = sbr.rel (%p249) target = $region40
        $region39: #{tpu_custom_call.1} parent=11 // pred_region
          _
        $region40: #{tpu_custom_call.1} parent=11 // pred_fallthru
          _
      $region12: #{tpu_custom_call.1} parent=5 // pred_fallthru
        _
      %p252 = scmp.lt.s32.totalorder %s18, 4
      // Predicated region
      $region41: #{tpu_custom_call.1} parent=5 // pred_check
        %p253 = pneg %p252
      $region42: #{tpu_custom_call.1} parent=5 // pred_check_branch
        %255 = sbr.rel (%p253) target = $region44
      $region43: #{tpu_custom_call.1} parent=5 // pred_region
        _
      $region44: #{tpu_custom_call.1} parent=5 // pred_fallthru
        _
      %p256 = scmp.le.s32.totalorder 1, %s18
      %p257 = scmp.lt.s32.totalorder %s18, 5
      %p258 = pnand %p256, %p257
      %p259 = pneg %p258
      // Predicated region
      $region45: #{tpu_custom_call.1} parent=5 // pred_check
        _
      $region46: #{tpu_custom_call.1} parent=5 // pred_check_branch
        %261 = sbr.rel (%p258) target = $region48
      $region47: #{tpu_custom_call.1} parent=5 // pred_region
        %s262 = ssub.s32 %s18, 1
        %p263 = pneg %p58
        %p264 = pneg %p55
        %p265 = pneg %p79
        %p266 = pneg %p76
        %p267 = pneg %p100
        %p268 = pneg %p97
        %p269 = pneg %p121
        %p270 = pneg %p118
        %p271 = pneg %p142
        %p272 = pneg %p139
        %p273 = pneg %p163
        %p274 = pneg %p160
        %p275 = pneg %p184
        %p276 = pneg %p181
        %p277 = pneg %p216
        %p278 = pneg %p213
        %s279 = sand.u32 %s203, 1
        %s280 = scalar_lea.sflag [#allocation8], %s279
        %s281 = sand.u32 %s203, 1
        %s282 = smul.addr %s281, 64
        %s283 = scalar_lea.vmem [#allocation7], %s282
        %s284 = smul.u32 %s29, 2
        %s285 = sadd.s32 %s284, %s30
        %s286 = smul.u32 2, %s285
        %p288 = scmp.eq.s32.totalorder %s30, 0
        // Predicated region
        $region49: #{tpu_custom_call.1} parent=47 // pred_check
          %p289 = pneg %p288
        $region50: #{tpu_custom_call.1} parent=47 // pred_check_branch
          %291 = sbr.rel (%p289) target = $region52
        $region51: #{tpu_custom_call.1} parent=47 // pred_region
          %s292 = smul.u32 %s28, 16
          %s293 = smul.addr %s292, 8
          %s294 = scalar_lea.hbm %s0, %s293
          // Predicated region
          $region53: #{tpu_custom_call.1} parent=51 // pred_check
            _
          $region54: #{tpu_custom_call.1} parent=51 // pred_check_branch
            %296 = sbr.rel target = $region56
          $region55: #{tpu_custom_call.1} parent=51 // pred_region
            %297 = sst [smem:[#allocation11]] [#allocation10]
            %298 = sst [smem:[#allocation12]] [#allocation9]
          $region56: #{tpu_custom_call.1} parent=51 // pred_fallthru
            _
          %300 = shalt.err (0)
          %s302 = sshll.u32 %s294, 4
          %s303 = int_to_ptr.hbm [resolvable:$true] %s302
          %s304 = sshll.u32 [#allocation2], 4
          %s305 = int_to_ptr.vmem [resolvable:$true] %s304
          %307 = dma.hbm_to_vmem [thread:$0]  %s303, 2048, %s305, [#allocation5]
          %s308 = smul.u32 8, 4
          %s309 = smul.u32 %s308, 4
          %s310 = sshll.u32 %s309, 4
          %311 = dma.done [#allocation5], %s310
          %v312 = vld [vmem:[#allocation2] sm:$0xff]
          %v313 = vld [vmem:[#allocation2 + $0x8] sm:$0xff]
          %v314 = vld [vmem:[#allocation2 + $0x10] sm:$0xff]
          %v315 = vld [vmem:[#allocation2 + $0x18] sm:$0xff]
          %v316 = vld [vmem:[#allocation2 + $0x20] sm:$0xff]
          %v317 = vld [vmem:[#allocation2 + $0x28] sm:$0xff]
          %v318 = vld [vmem:[#allocation2 + $0x30] sm:$0xff]
          %v319 = vld [vmem:[#allocation2 + $0x38] sm:$0xff]
          %v320 = vld [vmem:[#allocation2 + $0x40] sm:$0xff]
          %v321 = vld [vmem:[#allocation2 + $0x48] sm:$0xff]
          %v322 = vld [vmem:[#allocation2 + $0x50] sm:$0xff]
          %v323 = vld [vmem:[#allocation2 + $0x58] sm:$0xff]
          %v324 = vld [vmem:[#allocation2 + $0x60] sm:$0xff]
          %v325 = vld [vmem:[#allocation2 + $0x68] sm:$0xff]
          %v326 = vld [vmem:[#allocation2 + $0x70] sm:$0xff]
          %v327 = vld [vmem:[#allocation2 + $0x78] sm:$0xff]
          %v328 = vpack.c.bf16 %v316, %v312
          %v329 = vpack.c.bf16 %v317, %v313
          %v330 = vpack.c.bf16 %v318, %v314
          %v331 = vpack.c.bf16 %v319, %v315
          %v332 = vpack.c.bf16 %v324, %v320
          %v333 = vpack.c.bf16 %v325, %v321
          %v334 = vpack.c.bf16 %v326, %v322
          %v335 = vpack.c.bf16 %v327, %v323
          %v336 = vld [vmem:[%s3] sm:$0xf]
          %v337 = vld [vmem:[%s3 + $0x4] sm:$0xf]
          %v338 = vld [vmem:[%s3 + $0x8] sm:$0xf]
          %v339 = vld [vmem:[%s3 + $0xc] sm:$0xf]
          %v340 = vld [vmem:[%s6] sm:$0xff]
          %v341 = vld [vmem:[%s6 + $0x8] sm:$0xff]
          %v342 = vld [vmem:[%s6 + $0x10] sm:$0xff]
          %v343 = vld [vmem:[%s6 + $0x18] sm:$0xff]
          %345 = vset.pattern.permute.xlu0 0
          %346 = vperm.xlu0 %345, %v340
          %v347 = vpop.permute.xlu0 %346
          %350 = vset.pattern.permute.xlu0 0
          %351 = vperm.xlu0 %350, %v341
          %v352 = vpop.permute.xlu0 %351
          %355 = vset.pattern.permute.xlu0 0
          %356 = vperm.xlu0 %355, %v342
          %v357 = vpop.permute.xlu0 %356
          %360 = vset.pattern.permute.xlu0 0
          %361 = vperm.xlu0 %360, %v343
          %v362 = vpop.permute.xlu0 %361
          %v368 = vunpack.c.l.b16 %v336
          %v369 = vunpack.c.l.b16 %v337
          %v370 = vunpack.c.l.b16 %v338
          %v371 = vunpack.c.l.b16 %v339
          %v372 = vpack.c.b16 %v369, %v368
          %v373 = vpack.c.b16 %v371, %v370
          %vm374 = vcmask 261120
          %v376 = vsel %vm374, %v372, 0
          %v379 = vsel %vm374, %v373, 0
          %381 = vmatpush.bf16.msra.mxu0 0
          %382 = vmatpush.bf16.msra.mxu0 0
          %383 = vmatpush.bf16.msra.mxu0 0
          %384 = vmatpush.bf16.msra.mxu0 0
          %385 = vmatpush.bf16.msra.mxu0 0
          %386 = vmatpush.bf16.msra.mxu0 0
          %387 = vmatpush.bf16.msra.mxu0 %v332
          %388 = vmatpush.bf16.msra.mxu0 %v328
          %389 = vmatmul.bf16.gmra.mxu0 %v376
          %v390 = vpop.f32.mrf.mxu0
          %v391 = vadd.f32 %v347, %v390
          %v392 = vpop.f32.mrf.mxu0
          %v393 = vadd.f32 %v352, %v392
          %394 = vmatmul.bf16.gmra.mxu0 %v379
          %v395 = vpop.f32.mrf.mxu0
          %v396 = vadd.f32 %v357, %v395
          %v397 = vpop.f32.mrf.mxu0
          %v398 = vadd.f32 %v362, %v397
          %399 = vdwg.mxu0
          %400 = vmatpush.bf16.msra.mxu0 0
          %401 = vmatpush.bf16.msra.mxu0 0
          %402 = vmatpush.bf16.msra.mxu0 0
          %403 = vmatpush.bf16.msra.mxu0 0
          %404 = vmatpush.bf16.msra.mxu0 0
          %405 = vmatpush.bf16.msra.mxu0 0
          %406 = vmatpush.bf16.msra.mxu0 %v333
          %407 = vmatpush.bf16.msra.mxu0 %v329
          %408 = vmatmul.bf16.gmra.mxu0 %v376
          %v409 = vpop.f32.mrf.mxu0
          %v410 = vadd.f32 %v347, %v409
          %v411 = vpop.f32.mrf.mxu0
          %v412 = vadd.f32 %v352, %v411
          %413 = vmatmul.bf16.gmra.mxu0 %v379
          %v414 = vpop.f32.mrf.mxu0
          %v415 = vadd.f32 %v357, %v414
          %v416 = vpop.f32.mrf.mxu0
          %v417 = vadd.f32 %v362, %v416
          %418 = vdwg.mxu0
          %419 = vmatpush.bf16.msra.mxu0 0
          %420 = vmatpush.bf16.msra.mxu0 0
          %421 = vmatpush.bf16.msra.mxu0 0
          %422 = vmatpush.bf16.msra.mxu0 0
          %423 = vmatpush.bf16.msra.mxu0 0
          %424 = vmatpush.bf16.msra.mxu0 0
          %425 = vmatpush.bf16.msra.mxu0 %v334
          %426 = vmatpush.bf16.msra.mxu0 %v330
          %427 = vmatmul.bf16.gmra.mxu0 %v376
          %v428 = vpop.f32.mrf.mxu0
          %v429 = vadd.f32 %v347, %v428
          %v430 = vpop.f32.mrf.mxu0
          %v431 = vadd.f32 %v352, %v430
          %432 = vmatmul.bf16.gmra.mxu0 %v379
          %v433 = vpop.f32.mrf.mxu0
          %v434 = vadd.f32 %v357, %v433
          %v435 = vpop.f32.mrf.mxu0
          %v436 = vadd.f32 %v362, %v435
          %437 = vdwg.mxu0
          %438 = vmatpush.bf16.msra.mxu0 0
          %439 = vmatpush.bf16.msra.mxu0 0
          %440 = vmatpush.bf16.msra.mxu0 0
          %441 = vmatpush.bf16.msra.mxu0 0
          %442 = vmatpush.bf16.msra.mxu0 0
          %443 = vmatpush.bf16.msra.mxu0 0
          %444 = vmatpush.bf16.msra.mxu0 %v335
          %445 = vmatpush.bf16.msra.mxu0 %v331
          %446 = vmatmul.bf16.gmra.mxu0 %v376
          %v447 = vpop.f32.mrf.mxu0
          %v448 = vadd.f32 %v347, %v447
          %v449 = vpop.f32.mrf.mxu0
          %v450 = vadd.f32 %v352, %v449
          %451 = vmatmul.bf16.gmra.mxu0 %v379
          %v452 = vpop.f32.mrf.mxu0
          %v453 = vadd.f32 %v357, %v452
          %v454 = vpop.f32.mrf.mxu0
          %v455 = vadd.f32 %v362, %v454
          %456 = vdwg.mxu0
          %v457 = vpack.c.bf16 %v410, %v391
          %v458 = vpack.c.bf16 %v448, %v429
          %v459 = vpack.c.bf16 %v412, %v393
          %v460 = vpack.c.bf16 %v450, %v431
          %v461 = vpack.c.bf16 %v415, %v396
          %v462 = vpack.c.bf16 %v453, %v434
          %v463 = vpack.c.bf16 %v417, %v398
          %v464 = vpack.c.bf16 %v455, %v436
          %465 = vst [vmem:[#allocation4] sm:$0xff] %v457
          %466 = vst [vmem:[#allocation4 + $0x8] sm:$0xff] %v458
          %467 = vst [vmem:[#allocation4 + $0x10] sm:$0xff] %v459
          %468 = vst [vmem:[#allocation4 + $0x18] sm:$0xff] %v460
          %469 = vst [vmem:[#allocation4 + $0x20] sm:$0xff] %v461
          %470 = vst [vmem:[#allocation4 + $0x28] sm:$0xff] %v462
          %471 = vst [vmem:[#allocation4 + $0x30] sm:$0xff] %v463
          %472 = vst [vmem:[#allocation4 + $0x38] sm:$0xff] %v464
          %v473 = vld [vmem:[%s2] sm:$0x3]
          %v474 = vld [vmem:[%s5] sm:$0x1]
          %v476 = vperm.slane %v474, 0
          %478 = vxpose.binary.xlu0.c.b16.start [1/16] %v329, %v328, 128
          %479 = vxpose.binary.xlu0.c.b16.cont [2/16] %v333, %v332, 128
          %480 = vxpose.binary.xlu0.c.b16.cont [3/16] 0, 0, 128
          %481 = vxpose.binary.xlu0.c.b16.cont [4/16] 0, 0, 128
          %482 = vxpose.binary.xlu0.c.b16.cont [5/16] 0, 0, 128
          %483 = vxpose.binary.xlu0.c.b16.cont [6/16] 0, 0, 128
          %484 = vxpose.binary.xlu0.c.b16.cont [7/16] 0, 0, 128
          %485 = vxpose.binary.xlu0.c.b16.end [8/16] 0, 0, 128
          %v486 = vpop.trf.xlu0
          %v487 = vpop.trf.xlu0
          %v488 = vpop.trf.xlu0
          %v489 = vpop.trf.xlu0
          %v490 = vpop.trf.xlu0
          %v491 = vpop.trf.xlu0
          %v492 = vpop.trf.xlu0
          %v493 = vpop.trf.xlu0
          %v494 = vpop.trf.xlu0
          %v495 = vpop.trf.xlu0
          %v496 = vpop.trf.xlu0
          %v497 = vpop.trf.xlu0
          %v498 = vpop.trf.xlu0
          %v499 = vpop.trf.xlu0
          %v500 = vpop.trf.xlu0
          %v501 = vpop.trf.xlu0
          %502 = vxpose.binary.xlu0.c.b16.start [1/16] %v331, %v330, 128
          %503 = vxpose.binary.xlu0.c.b16.cont [2/16] %v335, %v334, 128
          %504 = vxpose.binary.xlu0.c.b16.cont [3/16] 0, 0, 128
          %505 = vxpose.binary.xlu0.c.b16.cont [4/16] 0, 0, 128
          %506 = vxpose.binary.xlu0.c.b16.cont [5/16] 0, 0, 128
          %507 = vxpose.binary.xlu0.c.b16.cont [6/16] 0, 0, 128
          %508 = vxpose.binary.xlu0.c.b16.cont [7/16] 0, 0, 128
          %509 = vxpose.binary.xlu0.c.b16.end [8/16] 0, 0, 128
          %v510 = vpop.trf.xlu0
          %v511 = vpop.trf.xlu0
          %v512 = vpop.trf.xlu0
          %v513 = vpop.trf.xlu0
          %v514 = vpop.trf.xlu0
          %v515 = vpop.trf.xlu0
          %v516 = vpop.trf.xlu0
          %v517 = vpop.trf.xlu0
          %v518 = vpop.trf.xlu0
          %v519 = vpop.trf.xlu0
          %v520 = vpop.trf.xlu0
          %v521 = vpop.trf.xlu0
          %v522 = vpop.trf.xlu0
          %v523 = vpop.trf.xlu0
          %v524 = vpop.trf.xlu0
          %v525 = vpop.trf.xlu0
          %v527 = vsel %vm374, %v486, 0
          %v530 = vsel %vm374, %v488, 0
          %v533 = vsel %vm374, %v490, 0
          %v536 = vsel %vm374, %v492, 0
          %v539 = vsel %vm374, %v494, 0
          %v542 = vsel %vm374, %v496, 0
          %v545 = vsel %vm374, %v498, 0
          %v548 = vsel %vm374, %v500, 0
          %v551 = vsel %vm374, %v487, 0
          %v554 = vsel %vm374, %v489, 0
          %v557 = vsel %vm374, %v491, 0
          %v560 = vsel %vm374, %v493, 0
          %v563 = vsel %vm374, %v495, 0
          %v566 = vsel %vm374, %v497, 0
          %v569 = vsel %vm374, %v499, 0
          %v572 = vsel %vm374, %v501, 0
          %v575 = vsel %vm374, %v510, 0
          %v578 = vsel %vm374, %v512, 0
          %v581 = vsel %vm374, %v514, 0
          %v584 = vsel %vm374, %v516, 0
          %v587 = vsel %vm374, %v518, 0
          %v590 = vsel %vm374, %v520, 0
          %v593 = vsel %vm374, %v522, 0
          %v596 = vsel %vm374, %v524, 0
          %v599 = vsel %vm374, %v511, 0
          %v602 = vsel %vm374, %v513, 0
          %v605 = vsel %vm374, %v515, 0
          %v608 = vsel %vm374, %v517, 0
          %v611 = vsel %vm374, %v519, 0
          %v614 = vsel %vm374, %v521, 0
          %v617 = vsel %vm374, %v523, 0
          %v620 = vsel %vm374, %v525, 0
          %v623 = vsel %vm374, %v473, 0
          %625 = vmatpush.bf16.xpose.msra.mxu0 0
          %626 = vmatpush.bf16.xpose.msra.mxu0 0
          %627 = vmatpush.bf16.xpose.msra.mxu0 0
          %628 = vmatpush.bf16.xpose.msra.mxu0 0
          %629 = vmatpush.bf16.xpose.msra.mxu0 0
          %630 = vmatpush.bf16.xpose.msra.mxu0 0
          %631 = vmatpush.bf16.xpose.msra.mxu0 0
          %632 = vmatpush.bf16.xpose.msra.mxu0 %v623
          %633 = vmatmul.bf16.gmra.mxu0 %v527
          %v634 = vpop.f32.mrf.mxu0
          %v635 = vadd.f32 %v476, %v634
          %v636 = vpop.f32.mrf.mxu0
          %v637 = vadd.f32 %v476, %v636
          %638 = vmatmul.bf16.gmra.mxu0 %v530
          %v639 = vpop.f32.mrf.mxu0
          %v640 = vadd.f32 %v476, %v639
          %v641 = vpop.f32.mrf.mxu0
          %v642 = vadd.f32 %v476, %v641
          %643 = vmatmul.bf16.gmra.mxu0 %v533
          %v644 = vpop.f32.mrf.mxu0
          %v645 = vadd.f32 %v476, %v644
          %v646 = vpop.f32.mrf.mxu0
          %v647 = vadd.f32 %v476, %v646
          %648 = vmatmul.bf16.gmra.mxu0 %v536
          %v649 = vpop.f32.mrf.mxu0
          %v650 = vadd.f32 %v476, %v649
          %v651 = vpop.f32.mrf.mxu0
          %v652 = vadd.f32 %v476, %v651
          %653 = vmatmul.bf16.gmra.mxu0 %v539
          %v654 = vpop.f32.mrf.mxu0
          %v655 = vadd.f32 %v476, %v654
          %v656 = vpop.f32.mrf.mxu0
          %v657 = vadd.f32 %v476, %v656
          %658 = vmatmul.bf16.gmra.mxu0 %v542
          %v659 = vpop.f32.mrf.mxu0
          %v660 = vadd.f32 %v476, %v659
          %v661 = vpop.f32.mrf.mxu0
          %v662 = vadd.f32 %v476, %v661
          %663 = vmatmul.bf16.gmra.mxu0 %v545
          %v664 = vpop.f32.mrf.mxu0
          %v665 = vadd.f32 %v476, %v664
          %v666 = vpop.f32.mrf.mxu0
          %v667 = vadd.f32 %v476, %v666
          %668 = vmatmul.bf16.gmra.mxu0 %v548
          %v669 = vpop.f32.mrf.mxu0
          %v670 = vadd.f32 %v476, %v669
          %v671 = vpop.f32.mrf.mxu0
          %v672 = vadd.f32 %v476, %v671
          %673 = vmatmul.bf16.gmra.mxu0 %v551
          %v674 = vpop.f32.mrf.mxu0
          %v675 = vadd.f32 %v476, %v674
          %v676 = vpop.f32.mrf.mxu0
          %v677 = vadd.f32 %v476, %v676
          %678 = vmatmul.bf16.gmra.mxu0 %v554
          %v679 = vpop.f32.mrf.mxu0
          %v680 = vadd.f32 %v476, %v679
          %v681 = vpop.f32.mrf.mxu0
          %v682 = vadd.f32 %v476, %v681
          %683 = vmatmul.bf16.gmra.mxu0 %v557
          %v684 = vpop.f32.mrf.mxu0
          %v685 = vadd.f32 %v476, %v684
          %v686 = vpop.f32.mrf.mxu0
          %v687 = vadd.f32 %v476, %v686
          %688 = vmatmul.bf16.gmra.mxu0 %v560
          %v689 = vpop.f32.mrf.mxu0
          %v690 = vadd.f32 %v476, %v689
          %v691 = vpop.f32.mrf.mxu0
          %v692 = vadd.f32 %v476, %v691
          %693 = vmatmul.bf16.gmra.mxu0 %v563
          %v694 = vpop.f32.mrf.mxu0
          %v695 = vadd.f32 %v476, %v694
          %v696 = vpop.f32.mrf.mxu0
          %v697 = vadd.f32 %v476, %v696
          %698 = vmatmul.bf16.gmra.mxu0 %v566
          %v699 = vpop.f32.mrf.mxu0
          %v700 = vadd.f32 %v476, %v699
          %v701 = vpop.f32.mrf.mxu0
          %v702 = vadd.f32 %v476, %v701
          %703 = vmatmul.bf16.gmra.mxu0 %v569
          %v704 = vpop.f32.mrf.mxu0
          %v705 = vadd.f32 %v476, %v704
          %v706 = vpop.f32.mrf.mxu0
          %v707 = vadd.f32 %v476, %v706
          %708 = vmatmul.bf16.gmra.mxu0 %v572
          %v709 = vpop.f32.mrf.mxu0
          %v710 = vadd.f32 %v476, %v709
          %v711 = vpop.f32.mrf.mxu0
          %v712 = vadd.f32 %v476, %v711
          %713 = vmatmul.bf16.gmra.mxu0 %v575
          %v714 = vpop.f32.mrf.mxu0
          %v715 = vadd.f32 %v476, %v714
          %v716 = vpop.f32.mrf.mxu0
          %v717 = vadd.f32 %v476, %v716
          %718 = vmatmul.bf16.gmra.mxu0 %v578
          %v719 = vpop.f32.mrf.mxu0
          %v720 = vadd.f32 %v476, %v719
          %v721 = vpop.f32.mrf.mxu0
          %v722 = vadd.f32 %v476, %v721
          %723 = vmatmul.bf16.gmra.mxu0 %v581
          %v724 = vpop.f32.mrf.mxu0
          %v725 = vadd.f32 %v476, %v724
          %v726 = vpop.f32.mrf.mxu0
          %v727 = vadd.f32 %v476, %v726
          %728 = vmatmul.bf16.gmra.mxu0 %v584
          %v729 = vpop.f32.mrf.mxu0
          %v730 = vadd.f32 %v476, %v729
          %v731 = vpop.f32.mrf.mxu0
          %v732 = vadd.f32 %v476, %v731
          %733 = vmatmul.bf16.gmra.mxu0 %v587
          %v734 = vpop.f32.mrf.mxu0
          %v735 = vadd.f32 %v476, %v734
          %v736 = vpop.f32.mrf.mxu0
          %v737 = vadd.f32 %v476, %v736
          %738 = vmatmul.bf16.gmra.mxu0 %v590
          %v739 = vpop.f32.mrf.mxu0
          %v740 = vadd.f32 %v476, %v739
          %v741 = vpop.f32.mrf.mxu0
          %v742 = vadd.f32 %v476, %v741
          %743 = vmatmul.bf16.gmra.mxu0 %v593
          %v744 = vpop.f32.mrf.mxu0
          %v745 = vadd.f32 %v476, %v744
          %v746 = vpop.f32.mrf.mxu0
          %v747 = vadd.f32 %v476, %v746
          %748 = vmatmul.bf16.gmra.mxu0 %v596
          %v749 = vpop.f32.mrf.mxu0
          %v750 = vadd.f32 %v476, %v749
          %v751 = vpop.f32.mrf.mxu0
          %v752 = vadd.f32 %v476, %v751
          %753 = vmatmul.bf16.gmra.mxu0 %v599
          %v754 = vpop.f32.mrf.mxu0
          %v755 = vadd.f32 %v476, %v754
          %v756 = vpop.f32.mrf.mxu0
          %v757 = vadd.f32 %v476, %v756
          %758 = vmatmul.bf16.gmra.mxu0 %v602
          %v759 = vpop.f32.mrf.mxu0
          %v760 = vadd.f32 %v476, %v759
          %v761 = vpop.f32.mrf.mxu0
          %v762 = vadd.f32 %v476, %v761
          %763 = vmatmul.bf16.gmra.mxu0 %v605
          %v764 = vpop.f32.mrf.mxu0
          %v765 = vadd.f32 %v476, %v764
          %v766 = vpop.f32.mrf.mxu0
          %v767 = vadd.f32 %v476, %v766
          %768 = vmatmul.bf16.gmra.mxu0 %v608
          %v769 = vpop.f32.mrf.mxu0
          %v770 = vadd.f32 %v476, %v769
          %v771 = vpop.f32.mrf.mxu0
          %v772 = vadd.f32 %v476, %v771
          %773 = vmatmul.bf16.gmra.mxu0 %v611
          %v774 = vpop.f32.mrf.mxu0
          %v775 = vadd.f32 %v476, %v774
          %v776 = vpop.f32.mrf.mxu0
          %v777 = vadd.f32 %v476, %v776
          %778 = vmatmul.bf16.gmra.mxu0 %v614
          %v779 = vpop.f32.mrf.mxu0
          %v780 = vadd.f32 %v476, %v779
          %v781 = vpop.f32.mrf.mxu0
          %v782 = vadd.f32 %v476, %v781
          %783 = vmatmul.bf16.gmra.mxu0 %v617
          %v784 = vpop.f32.mrf.mxu0
          %v785 = vadd.f32 %v476, %v784
          %v786 = vpop.f32.mrf.mxu0
          %v787 = vadd.f32 %v476, %v786
          %788 = vmatmul.bf16.gmra.mxu0 %v620
          %v789 = vpop.f32.mrf.mxu0
          %v790 = vadd.f32 %v476, %v789
          %v791 = vpop.f32.mrf.mxu0
          %v792 = vadd.f32 %v476, %v791
          %793 = vdwg.mxu0
          %v794 = vpack.c.bf16 %v635, %v635
          %v795 = vpack.c.bf16 %v637, %v637
          %v796 = vpack.c.bf16 %v640, %v640
          %v797 = vpack.c.bf16 %v642, %v642
          %v798 = vpack.c.bf16 %v645, %v645
          %v799 = vpack.c.bf16 %v647, %v647
          %v800 = vpack.c.bf16 %v650, %v650
          %v801 = vpack.c.bf16 %v652, %v652
          %v802 = vpack.c.bf16 %v655, %v655
          %v803 = vpack.c.bf16 %v657, %v657
          %v804 = vpack.c.bf16 %v660, %v660
          %v805 = vpack.c.bf16 %v662, %v662
          %v806 = vpack.c.bf16 %v665, %v665
          %v807 = vpack.c.bf16 %v667, %v667
          %v808 = vpack.c.bf16 %v670, %v670
          %v809 = vpack.c.bf16 %v672, %v672
          %v810 = vpack.c.bf16 %v675, %v675
          %v811 = vpack.c.bf16 %v677, %v677
          %v812 = vpack.c.bf16 %v680, %v680
          %v813 = vpack.c.bf16 %v682, %v682
          %v814 = vpack.c.bf16 %v685, %v685
          %v815 = vpack.c.bf16 %v687, %v687
          %v816 = vpack.c.bf16 %v690, %v690
          %v817 = vpack.c.bf16 %v692, %v692
          %v818 = vpack.c.bf16 %v695, %v695
          %v819 = vpack.c.bf16 %v697, %v697
          %v820 = vpack.c.bf16 %v700, %v700
          %v821 = vpack.c.bf16 %v702, %v702
          %v822 = vpack.c.bf16 %v705, %v705
          %v823 = vpack.c.bf16 %v707, %v707
          %v824 = vpack.c.bf16 %v710, %v710
          %v825 = vpack.c.bf16 %v712, %v712
          %v826 = vpack.c.bf16 %v715, %v715
          %v827 = vpack.c.bf16 %v717, %v717
          %v828 = vpack.c.bf16 %v720, %v720
          %v829 = vpack.c.bf16 %v722, %v722
          %v830 = vpack.c.bf16 %v725, %v725
          %v831 = vpack.c.bf16 %v727, %v727
          %v832 = vpack.c.bf16 %v730, %v730
          %v833 = vpack.c.bf16 %v732, %v732
          %v834 = vpack.c.bf16 %v735, %v735
          %v835 = vpack.c.bf16 %v737, %v737
          %v836 = vpack.c.bf16 %v740, %v740
          %v837 = vpack.c.bf16 %v742, %v742
          %v838 = vpack.c.bf16 %v745, %v745
          %v839 = vpack.c.bf16 %v747, %v747
          %v840 = vpack.c.bf16 %v750, %v750
          %v841 = vpack.c.bf16 %v752, %v752
          %v842 = vpack.c.bf16 %v755, %v755
          %v843 = vpack.c.bf16 %v757, %v757
          %v844 = vpack.c.bf16 %v760, %v760
          %v845 = vpack.c.bf16 %v762, %v762
          %v846 = vpack.c.bf16 %v765, %v765
          %v847 = vpack.c.bf16 %v767, %v767
          %v848 = vpack.c.bf16 %v770, %v770
          %v849 = vpack.c.bf16 %v772, %v772
          %v850 = vpack.c.bf16 %v775, %v775
          %v851 = vpack.c.bf16 %v777, %v777
          %v852 = vpack.c.bf16 %v780, %v780
          %v853 = vpack.c.bf16 %v782, %v782
          %v854 = vpack.c.bf16 %v785, %v785
          %v855 = vpack.c.bf16 %v787, %v787
          %v856 = vpack.c.bf16 %v790, %v790
          %v857 = vpack.c.bf16 %v792, %v792
          %vm858 = vcmask 27648
          %859 = vst.msk [vmem:[#allocation3] sm:$0xf] %vm858, %v794
          %860 = vst.msk [vmem:[#allocation3 + $0x4] sm:$0xf] %vm858, %v795
          %861 = vst.msk [vmem:[#allocation3 + $0x8] sm:$0xf] %vm858, %v796
          %862 = vst.msk [vmem:[#allocation3 + $0xc] sm:$0xf] %vm858, %v797
          %863 = vst.msk [vmem:[#allocation3 + $0x10] sm:$0xf] %vm858, %v798
          %864 = vst.msk [vmem:[#allocation3 + $0x14] sm:$0xf] %vm858, %v799
          %865 = vst.msk [vmem:[#allocation3 + $0x18] sm:$0xf] %vm858, %v800
          %866 = vst.msk [vmem:[#allocation3 + $0x1c] sm:$0xf] %vm858, %v801
          %867 = vst.msk [vmem:[#allocation3 + $0x20] sm:$0xf] %vm858, %v802
          %868 = vst.msk [vmem:[#allocation3 + $0x24] sm:$0xf] %vm858, %v803
          %869 = vst.msk [vmem:[#allocation3 + $0x28] sm:$0xf] %vm858, %v804
          %870 = vst.msk [vmem:[#allocation3 + $0x2c] sm:$0xf] %vm858, %v805
          %871 = vst.msk [vmem:[#allocation3 + $0x30] sm:$0xf] %vm858, %v806
          %872 = vst.msk [vmem:[#allocation3 + $0x34] sm:$0xf] %vm858, %v807
          %873 = vst.msk [vmem:[#allocation3 + $0x38] sm:$0xf] %vm858, %v808
          %874 = vst.msk [vmem:[#allocation3 + $0x3c] sm:$0xf] %vm858, %v809
          %875 = vst.msk [vmem:[#allocation3 + $0x40] sm:$0xf] %vm858, %v810
          %876 = vst.msk [vmem:[#allocation3 + $0x44] sm:$0xf] %vm858, %v811
          %877 = vst.msk [vmem:[#allocation3 + $0x48] sm:$0xf] %vm858, %v812
          %878 = vst.msk [vmem:[#allocation3 + $0x4c] sm:$0xf] %vm858, %v813
          %879 = vst.msk [vmem:[#allocation3 + $0x50] sm:$0xf] %vm858, %v814
          %880 = vst.msk [vmem:[#allocation3 + $0x54] sm:$0xf] %vm858, %v815
          %881 = vst.msk [vmem:[#allocation3 + $0x58] sm:$0xf] %vm858, %v816
          %882 = vst.msk [vmem:[#allocation3 + $0x5c] sm:$0xf] %vm858, %v817
          %883 = vst.msk [vmem:[#allocation3 + $0x60] sm:$0xf] %vm858, %v818
          %884 = vst.msk [vmem:[#allocation3 + $0x64] sm:$0xf] %vm858, %v819
          %885 = vst.msk [vmem:[#allocation3 + $0x68] sm:$0xf] %vm858, %v820
          %886 = vst.msk [vmem:[#allocation3 + $0x6c] sm:$0xf] %vm858, %v821
          %887 = vst.msk [vmem:[#allocation3 + $0x70] sm:$0xf] %vm858, %v822
          %888 = vst.msk [vmem:[#allocation3 + $0x74] sm:$0xf] %vm858, %v823
          %889 = vst.msk [vmem:[#allocation3 + $0x78] sm:$0xf] %vm858, %v824
          %890 = vst.msk [vmem:[#allocation3 + $0x7c] sm:$0xf] %vm858, %v825
          %891 = vst.msk [vmem:[#allocation3 + $0x80] sm:$0xf] %vm858, %v826
          %892 = vst.msk [vmem:[#allocation3 + $0x84] sm:$0xf] %vm858, %v827
          %893 = vst.msk [vmem:[#allocation3 + $0x88] sm:$0xf] %vm858, %v828
          %894 = vst.msk [vmem:[#allocation3 + $0x8c] sm:$0xf] %vm858, %v829
          %895 = vst.msk [vmem:[#allocation3 + $0x90] sm:$0xf] %vm858, %v830
          %896 = vst.msk [vmem:[#allocation3 + $0x94] sm:$0xf] %vm858, %v831
          %897 = vst.msk [vmem:[#allocation3 + $0x98] sm:$0xf] %vm858, %v832
          %898 = vst.msk [vmem:[#allocation3 + $0x9c] sm:$0xf] %vm858, %v833
          %899 = vst.msk [vmem:[#allocation3 + $0xa0] sm:$0xf] %vm858, %v834
          %900 = vst.msk [vmem:[#allocation3 + $0xa4] sm:$0xf] %vm858, %v835
          %901 = vst.msk [vmem:[#allocation3 + $0xa8] sm:$0xf] %vm858, %v836
          %902 = vst.msk [vmem:[#allocation3 + $0xac] sm:$0xf] %vm858, %v837
          %903 = vst.msk [vmem:[#allocation3 + $0xb0] sm:$0xf] %vm858, %v838
          %904 = vst.msk [vmem:[#allocation3 + $0xb4] sm:$0xf] %vm858, %v839
          %905 = vst.msk [vmem:[#allocation3 + $0xb8] sm:$0xf] %vm858, %v840
          %906 = vst.msk [vmem:[#allocation3 + $0xbc] sm:$0xf] %vm858, %v841
          %907 = vst.msk [vmem:[#allocation3 + $0xc0] sm:$0xf] %vm858, %v842
          %908 = vst.msk [vmem:[#allocation3 + $0xc4] sm:$0xf] %vm858, %v843
          %909 = vst.msk [vmem:[#allocation3 + $0xc8] sm:$0xf] %vm858, %v844
          %910 = vst.msk [vmem:[#allocation3 + $0xcc] sm:$0xf] %vm858, %v845
          %911 = vst.msk [vmem:[#allocation3 + $0xd0] sm:$0xf] %vm858, %v846
          %912 = vst.msk [vmem:[#allocation3 + $0xd4] sm:$0xf] %vm858, %v847
          %913 = vst.msk [vmem:[#allocation3 + $0xd8] sm:$0xf] %vm858, %v848
          %914 = vst.msk [vmem:[#allocation3 + $0xdc] sm:$0xf] %vm858, %v849
          %915 = vst.msk [vmem:[#allocation3 + $0xe0] sm:$0xf] %vm858, %v850
          %916 = vst.msk [vmem:[#allocation3 + $0xe4] sm:$0xf] %vm858, %v851
          %917 = vst.msk [vmem:[#allocation3 + $0xe8] sm:$0xf] %vm858, %v852
          %918 = vst.msk [vmem:[#allocation3 + $0xec] sm:$0xf] %vm858, %v853
          %919 = vst.msk [vmem:[#allocation3 + $0xf0] sm:$0xf] %vm858, %v854
          %920 = vst.msk [vmem:[#allocation3 + $0xf4] sm:$0xf] %vm858, %v855
          %921 = vst.msk [vmem:[#allocation3 + $0xf8] sm:$0xf] %vm858, %v856
          %922 = vst.msk [vmem:[#allocation3 + $0xfc] sm:$0xf] %vm858, %v857
        $region52: #{tpu_custom_call.1} parent=47 // pred_fallthru
          _
        %s923 = smul.u32 %s29, 2
        %s924 = sadd.s32 %s923, %s30
        %s925 = smul.u32 %s924, 256
        %s926 = sshra.s32 %s925, 7
        %s927 = sand.u32 %s925, 127
        %s928 = smul.addr %s926, 8
        %s929 = scalar_lea.vmem [#allocation2], %s928
        %v930 = vld [vmem:[%s929] sm:$0xff]
        %v931 = vld [vmem:[%s929 + $0x8] sm:$0xff]
        %v932 = vld [vmem:[%s929 + $0x20] sm:$0xff]
        %v933 = vld [vmem:[%s929 + $0x28] sm:$0xff]
        %v934 = vld [vmem:[%s929 + $0x40] sm:$0xff]
        %v935 = vld [vmem:[%s929 + $0x48] sm:$0xff]
        %v936 = vld [vmem:[%s929 + $0x60] sm:$0xff]
        %v937 = vld [vmem:[%s929 + $0x68] sm:$0xff]
        %v938 = vld [vmem:[%s1] sm:$0x3]
        %v939 = vpack.c.bf16 %v932, %v930
        %v940 = vpack.c.bf16 %v933, %v931
        %v941 = vpack.c.bf16 %v936, %v934
        %v942 = vpack.c.bf16 %v937, %v935
        %v943 = vld [vmem:[%s4] sm:$0xf]
        %945 = vset.pattern.permute.xlu0 0
        %946 = vperm.xlu0 %945, %v943
        %v947 = vpop.permute.xlu0 %946
        %vm949 = vcmask 261120
        %v951 = vsel %vm949, %v938, 0
        %953 = vmatpush.bf16.msra.mxu0 0
        %954 = vmatpush.bf16.msra.mxu0 0
        %955 = vmatpush.bf16.msra.mxu0 0
        %956 = vmatpush.bf16.msra.mxu0 0
        %957 = vmatpush.bf16.msra.mxu0 0
        %958 = vmatpush.bf16.msra.mxu0 0
        %959 = vmatpush.bf16.msra.mxu0 %v941
        %960 = vmatpush.bf16.msra.mxu0 %v939
        %961 = vmatmul.bf16.gmra.mxu0 %v951
        %v962 = vpop.f32.mrf.mxu0
        %v963 = vadd.f32 %v947, %v962
        %v964 = vpop.f32.mrf.mxu0
        %965 = vdwg.mxu0
        %966 = vmatpush.bf16.msra.mxu0 0
        %967 = vmatpush.bf16.msra.mxu0 0
        %968 = vmatpush.bf16.msra.mxu0 0
        %969 = vmatpush.bf16.msra.mxu0 0
        %970 = vmatpush.bf16.msra.mxu0 0
        %971 = vmatpush.bf16.msra.mxu0 0
        %972 = vmatpush.bf16.msra.mxu0 %v942
        %973 = vmatpush.bf16.msra.mxu0 %v940
        %974 = vmatmul.bf16.gmra.mxu0 %v951
        %v975 = vpop.f32.mrf.mxu0
        %v976 = vadd.f32 %v947, %v975
        %v977 = vpop.f32.mrf.mxu0
        %978 = vdwg.mxu0
        %v979 = vpack.c.bf16 %v963, %v963
        %v980 = vpack.c.bf16 %v976, %v976
        %v981 = vld [vmem:[#allocation3] sm:$0xf]
        %v982 = vld [vmem:[#allocation3 + $0x4] sm:$0xf]
        %v983 = vld [vmem:[#allocation3 + $0x8] sm:$0xf]
        %v984 = vld [vmem:[#allocation3 + $0xc] sm:$0xf]
        %v985 = vld [vmem:[#allocation3 + $0x10] sm:$0xf]
        %v986 = vld [vmem:[#allocation3 + $0x14] sm:$0xf]
        %v987 = vld [vmem:[#allocation3 + $0x18] sm:$0xf]
        %v988 = vld [vmem:[#allocation3 + $0x1c] sm:$0xf]
        %v989 = vld [vmem:[#allocation3 + $0x20] sm:$0xf]
        %v990 = vld [vmem:[#allocation3 + $0x24] sm:$0xf]
        %v991 = vld [vmem:[#allocation3 + $0x28] sm:$0xf]
        %v992 = vld [vmem:[#allocation3 + $0x2c] sm:$0xf]
        %v993 = vld [vmem:[#allocation3 + $0x30] sm:$0xf]
        %v994 = vld [vmem:[#allocation3 + $0x34] sm:$0xf]
        %v995 = vld [vmem:[#allocation3 + $0x38] sm:$0xf]
        %v996 = vld [vmem:[#allocation3 + $0x3c] sm:$0xf]
        %v997 = vld [vmem:[#allocation3 + $0x40] sm:$0xf]
        %v998 = vld [vmem:[#allocation3 + $0x44] sm:$0xf]
        %v999 = vld [vmem:[#allocation3 + $0x48] sm:$0xf]
        %v1000 = vld [vmem:[#allocation3 + $0x4c] sm:$0xf]
        %v1001 = vld [vmem:[#allocation3 + $0x50] sm:$0xf]
        %v1002 = vld [vmem:[#allocation3 + $0x54] sm:$0xf]
        %v1003 = vld [vmem:[#allocation3 + $0x58] sm:$0xf]
        %v1004 = vld [vmem:[#allocation3 + $0x5c] sm:$0xf]
        %v1005 = vld [vmem:[#allocation3 + $0x60] sm:$0xf]
        %v1006 = vld [vmem:[#allocation3 + $0x64] sm:$0xf]
        %v1007 = vld [vmem:[#allocation3 + $0x68] sm:$0xf]
        %v1008 = vld [vmem:[#allocation3 + $0x6c] sm:$0xf]
        %v1009 = vld [vmem:[#allocation3 + $0x70] sm:$0xf]
        %v1010 = vld [vmem:[#allocation3 + $0x74] sm:$0xf]
        %v1011 = vld [vmem:[#allocation3 + $0x78] sm:$0xf]
        %v1012 = vld [vmem:[#allocation3 + $0x7c] sm:$0xf]
        %v1013 = vld [vmem:[#allocation3 + $0x80] sm:$0xf]
        %v1014 = vld [vmem:[#allocation3 + $0x84] sm:$0xf]
        %v1015 = vld [vmem:[#allocation3 + $0x88] sm:$0xf]
        %v1016 = vld [vmem:[#allocation3 + $0x8c] sm:$0xf]
        %v1017 = vld [vmem:[#allocation3 + $0x90] sm:$0xf]
        %v1018 = vld [vmem:[#allocation3 + $0x94] sm:$0xf]
        %v1019 = vld [vmem:[#allocation3 + $0x98] sm:$0xf]
        %v1020 = vld [vmem:[#allocation3 + $0x9c] sm:$0xf]
        %v1021 = vld [vmem:[#allocation3 + $0xa0] sm:$0xf]
        %v1022 = vld [vmem:[#allocation3 + $0xa4] sm:$0xf]
        %v1023 = vld [vmem:[#allocation3 + $0xa8] sm:$0xf]
        %v1024 = vld [vmem:[#allocation3 + $0xac] sm:$0xf]
        %v1025 = vld [vmem:[#allocation3 + $0xb0] sm:$0xf]
        %v1026 = vld [vmem:[#allocation3 + $0xb4] sm:$0xf]
        %v1027 = vld [vmem:[#allocation3 + $0xb8] sm:$0xf]
        %v1028 = vld [vmem:[#allocation3 + $0xbc] sm:$0xf]
        %v1029 = vld [vmem:[#allocation3 + $0xc0] sm:$0xf]
        %v1030 = vld [vmem:[#allocation3 + $0xc4] sm:$0xf]
        %v1031 = vld [vmem:[#allocation3 + $0xc8] sm:$0xf]
        %v1032 = vld [vmem:[#allocation3 + $0xcc] sm:$0xf]
        %v1033 = vld [vmem:[#allocation3 + $0xd0] sm:$0xf]
        %v1034 = vld [vmem:[#allocation3 + $0xd4] sm:$0xf]
        %v1035 = vld [vmem:[#allocation3 + $0xd8] sm:$0xf]
        %v1036 = vld [vmem:[#allocation3 + $0xdc] sm:$0xf]
        %v1037 = vld [vmem:[#allocation3 + $0xe0] sm:$0xf]
        %v1038 = vld [vmem:[#allocation3 + $0xe4] sm:$0xf]
        %v1039 = vld [vmem:[#allocation3 + $0xe8] sm:$0xf]
        %v1040 = vld [vmem:[#allocation3 + $0xec] sm:$0xf]
        %v1041 = vld [vmem:[#allocation3 + $0xf0] sm:$0xf]
        %v1042 = vld [vmem:[#allocation3 + $0xf4] sm:$0xf]
        %v1043 = vld [vmem:[#allocation3 + $0xf8] sm:$0xf]
        %v1044 = vld [vmem:[#allocation3 + $0xfc] sm:$0xf]
        %v1109 = vunpack.c.l.b16 %v981
        %v1110 = vunpack.c.l.b16 %v982
        %v1111 = vunpack.c.l.b16 %v983
        %v1112 = vunpack.c.l.b16 %v984
        %v1113 = vunpack.c.l.b16 %v985
        %v1114 = vunpack.c.l.b16 %v986
        %v1115 = vunpack.c.l.b16 %v987
        %v1116 = vunpack.c.l.b16 %v988
        %v1117 = vunpack.c.l.b16 %v989
        %v1118 = vunpack.c.l.b16 %v990
        %v1119 = vunpack.c.l.b16 %v991
        %v1120 = vunpack.c.l.b16 %v992
        %v1121 = vunpack.c.l.b16 %v993
        %v1122 = vunpack.c.l.b16 %v994
        %v1123 = vunpack.c.l.b16 %v995
        %v1124 = vunpack.c.l.b16 %v996
        %v1125 = vunpack.c.l.b16 %v997
        %v1126 = vunpack.c.l.b16 %v998
        %v1127 = vunpack.c.l.b16 %v999
        %v1128 = vunpack.c.l.b16 %v1000
        %v1129 = vunpack.c.l.b16 %v1001
        %v1130 = vunpack.c.l.b16 %v1002
        %v1131 = vunpack.c.l.b16 %v1003
        %v1132 = vunpack.c.l.b16 %v1004
        %v1133 = vunpack.c.l.b16 %v1005
        %v1134 = vunpack.c.l.b16 %v1006
        %v1135 = vunpack.c.l.b16 %v1007
        %v1136 = vunpack.c.l.b16 %v1008
        %v1137 = vunpack.c.l.b16 %v1009
        %v1138 = vunpack.c.l.b16 %v1010
        %v1139 = vunpack.c.l.b16 %v1011
        %v1140 = vunpack.c.l.b16 %v1012
        %v1141 = vunpack.c.l.b16 %v1013
        %v1142 = vunpack.c.l.b16 %v1014
        %v1143 = vunpack.c.l.b16 %v1015
        %v1144 = vunpack.c.l.b16 %v1016
        %v1145 = vunpack.c.l.b16 %v1017
        %v1146 = vunpack.c.l.b16 %v1018
        %v1147 = vunpack.c.l.b16 %v1019
        %v1148 = vunpack.c.l.b16 %v1020
        %v1149 = vunpack.c.l.b16 %v1021
        %v1150 = vunpack.c.l.b16 %v1022
        %v1151 = vunpack.c.l.b16 %v1023
        %v1152 = vunpack.c.l.b16 %v1024
        %v1153 = vunpack.c.l.b16 %v1025
        %v1154 = vunpack.c.l.b16 %v1026
        %v1155 = vunpack.c.l.b16 %v1027
        %v1156 = vunpack.c.l.b16 %v1028
        %v1157 = vunpack.c.l.b16 %v1029
        %v1158 = vunpack.c.l.b16 %v1030
        %v1159 = vunpack.c.l.b16 %v1031
        %v1160 = vunpack.c.l.b16 %v1032
        %v1161 = vunpack.c.l.b16 %v1033
        %v1162 = vunpack.c.l.b16 %v1034
        %v1163 = vunpack.c.l.b16 %v1035
        %v1164 = vunpack.c.l.b16 %v1036
        %v1165 = vunpack.c.l.b16 %v1037
        %v1166 = vunpack.c.l.b16 %v1038
        %v1167 = vunpack.c.l.b16 %v1039
        %v1168 = vunpack.c.l.b16 %v1040
        %v1169 = vunpack.c.l.b16 %v1041
        %v1170 = vunpack.c.l.b16 %v1042
        %v1171 = vunpack.c.l.b16 %v1043
        %v1172 = vunpack.c.l.b16 %v1044
        %v1173 = vpack.c.b16 %v1110, %v1109
        %v1174 = vpack.c.b16 %v1112, %v1111
        %v1175 = vpack.c.b16 %v1114, %v1113
        %v1176 = vpack.c.b16 %v1116, %v1115
        %v1177 = vpack.c.b16 %v1118, %v1117
        %v1178 = vpack.c.b16 %v1120, %v1119
        %v1179 = vpack.c.b16 %v1122, %v1121
        %v1180 = vpack.c.b16 %v1124, %v1123
        %v1181 = vpack.c.b16 %v1126, %v1125
        %v1182 = vpack.c.b16 %v1128, %v1127
        %v1183 = vpack.c.b16 %v1130, %v1129
        %v1184 = vpack.c.b16 %v1132, %v1131
        %v1185 = vpack.c.b16 %v1134, %v1133
        %v1186 = vpack.c.b16 %v1136, %v1135
        %v1187 = vpack.c.b16 %v1138, %v1137
        %v1188 = vpack.c.b16 %v1140, %v1139
        %v1189 = vpack.c.b16 %v1142, %v1141
        %v1190 = vpack.c.b16 %v1144, %v1143
        %v1191 = vpack.c.b16 %v1146, %v1145
        %v1192 = vpack.c.b16 %v1148, %v1147
        %v1193 = vpack.c.b16 %v1150, %v1149
        %v1194 = vpack.c.b16 %v1152, %v1151
        %v1195 = vpack.c.b16 %v1154, %v1153
        %v1196 = vpack.c.b16 %v1156, %v1155
        %v1197 = vpack.c.b16 %v1158, %v1157
        %v1198 = vpack.c.b16 %v1160, %v1159
        %v1199 = vpack.c.b16 %v1162, %v1161
        %v1200 = vpack.c.b16 %v1164, %v1163
        %v1201 = vpack.c.b16 %v1166, %v1165
        %v1202 = vpack.c.b16 %v1168, %v1167
        %v1203 = vpack.c.b16 %v1170, %v1169
        %v1204 = vpack.c.b16 %v1172, %v1171
        %vm1205 = vcmask 31744
        %v1207 = vsel %vm1205, %v1173, 0
        %v1210 = vsel %vm1205, %v1174, 0
        %v1213 = vsel %vm1205, %v1175, 0
        %v1216 = vsel %vm1205, %v1176, 0
        %v1219 = vsel %vm1205, %v1177, 0
        %v1222 = vsel %vm1205, %v1178, 0
        %v1225 = vsel %vm1205, %v1179, 0
        %v1228 = vsel %vm1205, %v1180, 0
        %v1231 = vsel %vm1205, %v1181, 0
        %v1234 = vsel %vm1205, %v1182, 0
        %v1237 = vsel %vm1205, %v1183, 0
        %v1240 = vsel %vm1205, %v1184, 0
        %v1243 = vsel %vm1205, %v1185, 0
        %v1246 = vsel %vm1205, %v1186, 0
        %v1249 = vsel %vm1205, %v1187, 0
        %v1252 = vsel %vm1205, %v1188, 0
        %v1255 = vsel %vm1205, %v1189, 0
        %v1258 = vsel %vm1205, %v1190, 0
        %v1261 = vsel %vm1205, %v1191, 0
        %v1264 = vsel %vm1205, %v1192, 0
        %v1267 = vsel %vm1205, %v1193, 0
        %v1270 = vsel %vm1205, %v1194, 0
        %v1273 = vsel %vm1205, %v1195, 0
        %v1276 = vsel %vm1205, %v1196, 0
        %v1279 = vsel %vm1205, %v1197, 0
        %v1282 = vsel %vm1205, %v1198, 0
        %v1285 = vsel %vm1205, %v1199, 0
        %v1288 = vsel %vm1205, %v1200, 0
        %v1291 = vsel %vm1205, %v1201, 0
        %v1294 = vsel %vm1205, %v1202, 0
        %v1297 = vsel %vm1205, %v1203, 0
        %v1300 = vsel %vm1205, %v1204, 0
        %vm1302 = vcmask 1041408
        %v1304 = vsel %vm1302, %v979, 0
        %v1307 = vsel %vm1302, %v980, 0
        %1309 = vmatpush.bf16.msra.mxu0 0
        %1310 = vmatpush.bf16.msra.mxu0 0
        %1311 = vmatpush.bf16.msra.mxu0 0
        %1312 = vmatpush.bf16.msra.mxu0 0
        %1313 = vmatpush.bf16.msra.mxu0 0
        %1314 = vmatpush.bf16.msra.mxu0 0
        %1315 = vmatpush.bf16.msra.mxu0 0
        %1316 = vmatpush.bf16.msra.mxu0 %v1304
        %1317 = vmatmul.bf16.gmra.mxu0 %v1207
        %v1318 = vpop.f32.mrf.mxu0
        %v1319 = vadd.f32 0.0, %v1318
        %v1320 = vpop.f32.mrf.mxu0
        %v1321 = vadd.f32 0.0, %v1320
        %1322 = vmatmul.bf16.gmra.mxu0 %v1210
        %v1323 = vpop.f32.mrf.mxu0
        %v1324 = vadd.f32 0.0, %v1323
        %v1325 = vpop.f32.mrf.mxu0
        %v1326 = vadd.f32 0.0, %v1325
        %1327 = vmatmul.bf16.gmra.mxu0 %v1213
        %v1328 = vpop.f32.mrf.mxu0
        %v1329 = vadd.f32 0.0, %v1328
        %v1330 = vpop.f32.mrf.mxu0
        %v1331 = vadd.f32 0.0, %v1330
        %1332 = vmatmul.bf16.gmra.mxu0 %v1216
        %v1333 = vpop.f32.mrf.mxu0
        %v1334 = vadd.f32 0.0, %v1333
        %v1335 = vpop.f32.mrf.mxu0
        %v1336 = vadd.f32 0.0, %v1335
        %1337 = vmatmul.bf16.gmra.mxu0 %v1219
        %v1338 = vpop.f32.mrf.mxu0
        %v1339 = vadd.f32 0.0, %v1338
        %v1340 = vpop.f32.mrf.mxu0
        %v1341 = vadd.f32 0.0, %v1340
        %1342 = vmatmul.bf16.gmra.mxu0 %v1222
        %v1343 = vpop.f32.mrf.mxu0
        %v1344 = vadd.f32 0.0, %v1343
        %v1345 = vpop.f32.mrf.mxu0
        %v1346 = vadd.f32 0.0, %v1345
        %1347 = vmatmul.bf16.gmra.mxu0 %v1225
        %v1348 = vpop.f32.mrf.mxu0
        %v1349 = vadd.f32 0.0, %v1348
        %v1350 = vpop.f32.mrf.mxu0
        %v1351 = vadd.f32 0.0, %v1350
        %1352 = vmatmul.bf16.gmra.mxu0 %v1228
        %v1353 = vpop.f32.mrf.mxu0
        %v1354 = vadd.f32 0.0, %v1353
        %v1355 = vpop.f32.mrf.mxu0
        %v1356 = vadd.f32 0.0, %v1355
        %1357 = vmatmul.bf16.gmra.mxu0 %v1231
        %v1358 = vpop.f32.mrf.mxu0
        %v1359 = vadd.f32 0.0, %v1358
        %v1360 = vpop.f32.mrf.mxu0
        %v1361 = vadd.f32 0.0, %v1360
        %1362 = vmatmul.bf16.gmra.mxu0 %v1234
        %v1363 = vpop.f32.mrf.mxu0
        %v1364 = vadd.f32 0.0, %v1363
        %v1365 = vpop.f32.mrf.mxu0
        %v1366 = vadd.f32 0.0, %v1365
        %1367 = vmatmul.bf16.gmra.mxu0 %v1237
        %v1368 = vpop.f32.mrf.mxu0
        %v1369 = vadd.f32 0.0, %v1368
        %v1370 = vpop.f32.mrf.mxu0
        %v1371 = vadd.f32 0.0, %v1370
        %1372 = vmatmul.bf16.gmra.mxu0 %v1240
        %v1373 = vpop.f32.mrf.mxu0
        %v1374 = vadd.f32 0.0, %v1373
        %v1375 = vpop.f32.mrf.mxu0
        %v1376 = vadd.f32 0.0, %v1375
        %1377 = vmatmul.bf16.gmra.mxu0 %v1243
        %v1378 = vpop.f32.mrf.mxu0
        %v1379 = vadd.f32 0.0, %v1378
        %v1380 = vpop.f32.mrf.mxu0
        %v1381 = vadd.f32 0.0, %v1380
        %1382 = vmatmul.bf16.gmra.mxu0 %v1246
        %v1383 = vpop.f32.mrf.mxu0
        %v1384 = vadd.f32 0.0, %v1383
        %v1385 = vpop.f32.mrf.mxu0
        %v1386 = vadd.f32 0.0, %v1385
        %1387 = vmatmul.bf16.gmra.mxu0 %v1249
        %v1388 = vpop.f32.mrf.mxu0
        %v1389 = vadd.f32 0.0, %v1388
        %v1390 = vpop.f32.mrf.mxu0
        %v1391 = vadd.f32 0.0, %v1390
        %1392 = vmatmul.bf16.gmra.mxu0 %v1252
        %v1393 = vpop.f32.mrf.mxu0
        %v1394 = vadd.f32 0.0, %v1393
        %v1395 = vpop.f32.mrf.mxu0
        %v1396 = vadd.f32 0.0, %v1395
        %1397 = vmatmul.bf16.gmra.mxu0 %v1255
        %v1398 = vpop.f32.mrf.mxu0
        %v1399 = vadd.f32 0.0, %v1398
        %v1400 = vpop.f32.mrf.mxu0
        %v1401 = vadd.f32 0.0, %v1400
        %1402 = vmatmul.bf16.gmra.mxu0 %v1258
        %v1403 = vpop.f32.mrf.mxu0
        %v1404 = vadd.f32 0.0, %v1403
        %v1405 = vpop.f32.mrf.mxu0
        %v1406 = vadd.f32 0.0, %v1405
        %1407 = vmatmul.bf16.gmra.mxu0 %v1261
        %v1408 = vpop.f32.mrf.mxu0
        %v1409 = vadd.f32 0.0, %v1408
        %v1410 = vpop.f32.mrf.mxu0
        %v1411 = vadd.f32 0.0, %v1410
        %1412 = vmatmul.bf16.gmra.mxu0 %v1264
        %v1413 = vpop.f32.mrf.mxu0
        %v1414 = vadd.f32 0.0, %v1413
        %v1415 = vpop.f32.mrf.mxu0
        %v1416 = vadd.f32 0.0, %v1415
        %1417 = vmatmul.bf16.gmra.mxu0 %v1267
        %v1418 = vpop.f32.mrf.mxu0
        %v1419 = vadd.f32 0.0, %v1418
        %v1420 = vpop.f32.mrf.mxu0
        %v1421 = vadd.f32 0.0, %v1420
        %1422 = vmatmul.bf16.gmra.mxu0 %v1270
        %v1423 = vpop.f32.mrf.mxu0
        %v1424 = vadd.f32 0.0, %v1423
        %v1425 = vpop.f32.mrf.mxu0
        %v1426 = vadd.f32 0.0, %v1425
        %1427 = vmatmul.bf16.gmra.mxu0 %v1273
        %v1428 = vpop.f32.mrf.mxu0
        %v1429 = vadd.f32 0.0, %v1428
        %v1430 = vpop.f32.mrf.mxu0
        %v1431 = vadd.f32 0.0, %v1430
        %1432 = vmatmul.bf16.gmra.mxu0 %v1276
        %v1433 = vpop.f32.mrf.mxu0
        %v1434 = vadd.f32 0.0, %v1433
        %v1435 = vpop.f32.mrf.mxu0
        %v1436 = vadd.f32 0.0, %v1435
        %1437 = vmatmul.bf16.gmra.mxu0 %v1279
        %v1438 = vpop.f32.mrf.mxu0
        %v1439 = vadd.f32 0.0, %v1438
        %v1440 = vpop.f32.mrf.mxu0
        %v1441 = vadd.f32 0.0, %v1440
        %1442 = vmatmul.bf16.gmra.mxu0 %v1282
        %v1443 = vpop.f32.mrf.mxu0
        %v1444 = vadd.f32 0.0, %v1443
        %v1445 = vpop.f32.mrf.mxu0
        %v1446 = vadd.f32 0.0, %v1445
        %1447 = vmatmul.bf16.gmra.mxu0 %v1285
        %v1448 = vpop.f32.mrf.mxu0
        %v1449 = vadd.f32 0.0, %v1448
        %v1450 = vpop.f32.mrf.mxu0
        %v1451 = vadd.f32 0.0, %v1450
        %1452 = vmatmul.bf16.gmra.mxu0 %v1288
        %v1453 = vpop.f32.mrf.mxu0
        %v1454 = vadd.f32 0.0, %v1453
        %v1455 = vpop.f32.mrf.mxu0
        %v1456 = vadd.f32 0.0, %v1455
        %1457 = vmatmul.bf16.gmra.mxu0 %v1291
        %v1458 = vpop.f32.mrf.mxu0
        %v1459 = vadd.f32 0.0, %v1458
        %v1460 = vpop.f32.mrf.mxu0
        %v1461 = vadd.f32 0.0, %v1460
        %1462 = vmatmul.bf16.gmra.mxu0 %v1294
        %v1463 = vpop.f32.mrf.mxu0
        %v1464 = vadd.f32 0.0, %v1463
        %v1465 = vpop.f32.mrf.mxu0
        %v1466 = vadd.f32 0.0, %v1465
        %1467 = vmatmul.bf16.gmra.mxu0 %v1297
        %v1468 = vpop.f32.mrf.mxu0
        %v1469 = vadd.f32 0.0, %v1468
        %v1470 = vpop.f32.mrf.mxu0
        %v1471 = vadd.f32 0.0, %v1470
        %1472 = vmatmul.bf16.gmra.mxu0 %v1300
        %v1473 = vpop.f32.mrf.mxu0
        %v1474 = vadd.f32 0.0, %v1473
        %v1475 = vpop.f32.mrf.mxu0
        %v1476 = vadd.f32 0.0, %v1475
        %1477 = vdwg.mxu0
        %1478 = vmatpush.bf16.msra.mxu0 0
        %1479 = vmatpush.bf16.msra.mxu0 0
        %1480 = vmatpush.bf16.msra.mxu0 0
        %1481 = vmatpush.bf16.msra.mxu0 0
        %1482 = vmatpush.bf16.msra.mxu0 0
        %1483 = vmatpush.bf16.msra.mxu0 0
        %1484 = vmatpush.bf16.msra.mxu0 0
        %1485 = vmatpush.bf16.msra.mxu0 %v1307
        %1486 = vmatmul.bf16.gmra.mxu0 %v1207
        %v1487 = vpop.f32.mrf.mxu0
        %v1488 = vadd.f32 0.0, %v1487
        %v1489 = vpop.f32.mrf.mxu0
        %v1490 = vadd.f32 0.0, %v1489
        %1491 = vmatmul.bf16.gmra.mxu0 %v1210
        %v1492 = vpop.f32.mrf.mxu0
        %v1493 = vadd.f32 0.0, %v1492
        %v1494 = vpop.f32.mrf.mxu0
        %v1495 = vadd.f32 0.0, %v1494
        %1496 = vmatmul.bf16.gmra.mxu0 %v1213
        %v1497 = vpop.f32.mrf.mxu0
        %v1498 = vadd.f32 0.0, %v1497
        %v1499 = vpop.f32.mrf.mxu0
        %v1500 = vadd.f32 0.0, %v1499
        %1501 = vmatmul.bf16.gmra.mxu0 %v1216
        %v1502 = vpop.f32.mrf.mxu0
        %v1503 = vadd.f32 0.0, %v1502
        %v1504 = vpop.f32.mrf.mxu0
        %v1505 = vadd.f32 0.0, %v1504
        %1506 = vmatmul.bf16.gmra.mxu0 %v1219
        %v1507 = vpop.f32.mrf.mxu0
        %v1508 = vadd.f32 0.0, %v1507
        %v1509 = vpop.f32.mrf.mxu0
        %v1510 = vadd.f32 0.0, %v1509
        %1511 = vmatmul.bf16.gmra.mxu0 %v1222
        %v1512 = vpop.f32.mrf.mxu0
        %v1513 = vadd.f32 0.0, %v1512
        %v1514 = vpop.f32.mrf.mxu0
        %v1515 = vadd.f32 0.0, %v1514
        %1516 = vmatmul.bf16.gmra.mxu0 %v1225
        %v1517 = vpop.f32.mrf.mxu0
        %v1518 = vadd.f32 0.0, %v1517
        %v1519 = vpop.f32.mrf.mxu0
        %v1520 = vadd.f32 0.0, %v1519
        %1521 = vmatmul.bf16.gmra.mxu0 %v1228
        %v1522 = vpop.f32.mrf.mxu0
        %v1523 = vadd.f32 0.0, %v1522
        %v1524 = vpop.f32.mrf.mxu0
        %v1525 = vadd.f32 0.0, %v1524
        %1526 = vmatmul.bf16.gmra.mxu0 %v1231
        %v1527 = vpop.f32.mrf.mxu0
        %v1528 = vadd.f32 0.0, %v1527
        %v1529 = vpop.f32.mrf.mxu0
        %v1530 = vadd.f32 0.0, %v1529
        %1531 = vmatmul.bf16.gmra.mxu0 %v1234
        %v1532 = vpop.f32.mrf.mxu0
        %v1533 = vadd.f32 0.0, %v1532
        %v1534 = vpop.f32.mrf.mxu0
        %v1535 = vadd.f32 0.0, %v1534
        %1536 = vmatmul.bf16.gmra.mxu0 %v1237
        %v1537 = vpop.f32.mrf.mxu0
        %v1538 = vadd.f32 0.0, %v1537
        %v1539 = vpop.f32.mrf.mxu0
        %v1540 = vadd.f32 0.0, %v1539
        %1541 = vmatmul.bf16.gmra.mxu0 %v1240
        %v1542 = vpop.f32.mrf.mxu0
        %v1543 = vadd.f32 0.0, %v1542
        %v1544 = vpop.f32.mrf.mxu0
        %v1545 = vadd.f32 0.0, %v1544
        %1546 = vmatmul.bf16.gmra.mxu0 %v1243
        %v1547 = vpop.f32.mrf.mxu0
        %v1548 = vadd.f32 0.0, %v1547
        %v1549 = vpop.f32.mrf.mxu0
        %v1550 = vadd.f32 0.0, %v1549
        %1551 = vmatmul.bf16.gmra.mxu0 %v1246
        %v1552 = vpop.f32.mrf.mxu0
        %v1553 = vadd.f32 0.0, %v1552
        %v1554 = vpop.f32.mrf.mxu0
        %v1555 = vadd.f32 0.0, %v1554
        %1556 = vmatmul.bf16.gmra.mxu0 %v1249
        %v1557 = vpop.f32.mrf.mxu0
        %v1558 = vadd.f32 0.0, %v1557
        %v1559 = vpop.f32.mrf.mxu0
        %v1560 = vadd.f32 0.0, %v1559
        %1561 = vmatmul.bf16.gmra.mxu0 %v1252
        %v1562 = vpop.f32.mrf.mxu0
        %v1563 = vadd.f32 0.0, %v1562
        %v1564 = vpop.f32.mrf.mxu0
        %v1565 = vadd.f32 0.0, %v1564
        %1566 = vmatmul.bf16.gmra.mxu0 %v1255
        %v1567 = vpop.f32.mrf.mxu0
        %v1568 = vadd.f32 0.0, %v1567
        %v1569 = vpop.f32.mrf.mxu0
        %v1570 = vadd.f32 0.0, %v1569
        %1571 = vmatmul.bf16.gmra.mxu0 %v1258
        %v1572 = vpop.f32.mrf.mxu0
        %v1573 = vadd.f32 0.0, %v1572
        %v1574 = vpop.f32.mrf.mxu0
        %v1575 = vadd.f32 0.0, %v1574
        %1576 = vmatmul.bf16.gmra.mxu0 %v1261
        %v1577 = vpop.f32.mrf.mxu0
        %v1578 = vadd.f32 0.0, %v1577
        %v1579 = vpop.f32.mrf.mxu0
        %v1580 = vadd.f32 0.0, %v1579
        %1581 = vmatmul.bf16.gmra.mxu0 %v1264
        %v1582 = vpop.f32.mrf.mxu0
        %v1583 = vadd.f32 0.0, %v1582
        %v1584 = vpop.f32.mrf.mxu0
        %v1585 = vadd.f32 0.0, %v1584
        %1586 = vmatmul.bf16.gmra.mxu0 %v1267
        %v1587 = vpop.f32.mrf.mxu0
        %v1588 = vadd.f32 0.0, %v1587
        %v1589 = vpop.f32.mrf.mxu0
        %v1590 = vadd.f32 0.0, %v1589
        %1591 = vmatmul.bf16.gmra.mxu0 %v1270
        %v1592 = vpop.f32.mrf.mxu0
        %v1593 = vadd.f32 0.0, %v1592
        %v1594 = vpop.f32.mrf.mxu0
        %v1595 = vadd.f32 0.0, %v1594
        %1596 = vmatmul.bf16.gmra.mxu0 %v1273
        %v1597 = vpop.f32.mrf.mxu0
        %v1598 = vadd.f32 0.0, %v1597
        %v1599 = vpop.f32.mrf.mxu0
        %v1600 = vadd.f32 0.0, %v1599
        %1601 = vmatmul.bf16.gmra.mxu0 %v1276
        %v1602 = vpop.f32.mrf.mxu0
        %v1603 = vadd.f32 0.0, %v1602
        %v1604 = vpop.f32.mrf.mxu0
        %v1605 = vadd.f32 0.0, %v1604
        %1606 = vmatmul.bf16.gmra.mxu0 %v1279
        %v1607 = vpop.f32.mrf.mxu0
        %v1608 = vadd.f32 0.0, %v1607
        %v1609 = vpop.f32.mrf.mxu0
        %v1610 = vadd.f32 0.0, %v1609
        %1611 = vmatmul.bf16.gmra.mxu0 %v1282
        %v1612 = vpop.f32.mrf.mxu0
        %v1613 = vadd.f32 0.0, %v1612
        %v1614 = vpop.f32.mrf.mxu0
        %v1615 = vadd.f32 0.0, %v1614
        %1616 = vmatmul.bf16.gmra.mxu0 %v1285
        %v1617 = vpop.f32.mrf.mxu0
        %v1618 = vadd.f32 0.0, %v1617
        %v1619 = vpop.f32.mrf.mxu0
        %v1620 = vadd.f32 0.0, %v1619
        %1621 = vmatmul.bf16.gmra.mxu0 %v1288
        %v1622 = vpop.f32.mrf.mxu0
        %v1623 = vadd.f32 0.0, %v1622
        %v1624 = vpop.f32.mrf.mxu0
        %v1625 = vadd.f32 0.0, %v1624
        %1626 = vmatmul.bf16.gmra.mxu0 %v1291
        %v1627 = vpop.f32.mrf.mxu0
        %v1628 = vadd.f32 0.0, %v1627
        %v1629 = vpop.f32.mrf.mxu0
        %v1630 = vadd.f32 0.0, %v1629
        %1631 = vmatmul.bf16.gmra.mxu0 %v1294
        %v1632 = vpop.f32.mrf.mxu0
        %v1633 = vadd.f32 0.0, %v1632
        %v1634 = vpop.f32.mrf.mxu0
        %v1635 = vadd.f32 0.0, %v1634
        %1636 = vmatmul.bf16.gmra.mxu0 %v1297
        %v1637 = vpop.f32.mrf.mxu0
        %v1638 = vadd.f32 0.0, %v1637
        %v1639 = vpop.f32.mrf.mxu0
        %v1640 = vadd.f32 0.0, %v1639
        %1641 = vmatmul.bf16.gmra.mxu0 %v1300
        %v1642 = vpop.f32.mrf.mxu0
        %v1643 = vadd.f32 0.0, %v1642
        %v1644 = vpop.f32.mrf.mxu0
        %v1645 = vadd.f32 0.0, %v1644
        %1646 = vdwg.mxu0
        %v1647 = vmax.f32 %v1319, %v1324
        %v1648 = vmax.f32 %v1321, %v1326
        %v1649 = vmax.f32 %v1647, %v1329
        %v1650 = vmax.f32 %v1648, %v1331
        %v1651 = vmax.f32 %v1649, %v1334
        %v1652 = vmax.f32 %v1650, %v1336
        %v1653 = vmax.f32 %v1651, %v1339
        %v1654 = vmax.f32 %v1652, %v1341
        %v1655 = vmax.f32 %v1653, %v1344
        %v1656 = vmax.f32 %v1654, %v1346
        %v1657 = vmax.f32 %v1655, %v1349
        %v1658 = vmax.f32 %v1656, %v1351
        %v1659 = vmax.f32 %v1657, %v1354
        %v1660 = vmax.f32 %v1658, %v1356
        %v1661 = vmax.f32 %v1659, %v1359
        %v1662 = vmax.f32 %v1660, %v1361
        %v1663 = vmax.f32 %v1661, %v1364
        %v1664 = vmax.f32 %v1662, %v1366
        %v1665 = vmax.f32 %v1663, %v1369
        %v1666 = vmax.f32 %v1664, %v1371
        %v1667 = vmax.f32 %v1665, %v1374
        %v1668 = vmax.f32 %v1666, %v1376
        %v1669 = vmax.f32 %v1667, %v1379
        %v1670 = vmax.f32 %v1668, %v1381
        %v1671 = vmax.f32 %v1669, %v1384
        %v1672 = vmax.f32 %v1670, %v1386
        %v1673 = vmax.f32 %v1671, %v1389
        %v1674 = vmax.f32 %v1672, %v1391
        %v1675 = vmax.f32 %v1673, %v1394
        %v1676 = vmax.f32 %v1674, %v1396
        %v1677 = vmax.f32 %v1675, %v1399
        %v1678 = vmax.f32 %v1676, %v1401
        %v1679 = vmax.f32 %v1677, %v1404
        %v1680 = vmax.f32 %v1678, %v1406
        %v1681 = vmax.f32 %v1679, %v1409
        %v1682 = vmax.f32 %v1680, %v1411
        %v1683 = vmax.f32 %v1681, %v1414
        %v1684 = vmax.f32 %v1682, %v1416
        %v1685 = vmax.f32 %v1683, %v1419
        %v1686 = vmax.f32 %v1684, %v1421
        %v1687 = vmax.f32 %v1685, %v1424
        %v1688 = vmax.f32 %v1686, %v1426
        %v1689 = vmax.f32 %v1687, %v1429
        %v1690 = vmax.f32 %v1688, %v1431
        %v1691 = vmax.f32 %v1689, %v1434
        %v1692 = vmax.f32 %v1690, %v1436
        %v1693 = vmax.f32 %v1691, %v1439
        %v1694 = vmax.f32 %v1692, %v1441
        %v1695 = vmax.f32 %v1693, %v1444
        %v1696 = vmax.f32 %v1694, %v1446
        %v1697 = vmax.f32 %v1695, %v1449
        %v1698 = vmax.f32 %v1696, %v1451
        %v1699 = vmax.f32 %v1697, %v1454
        %v1700 = vmax.f32 %v1698, %v1456
        %v1701 = vmax.f32 %v1699, %v1459
        %v1702 = vmax.f32 %v1700, %v1461
        %v1703 = vmax.f32 %v1701, %v1464
        %v1704 = vmax.f32 %v1702, %v1466
        %v1705 = vmax.f32 %v1703, %v1469
        %v1706 = vmax.f32 %v1704, %v1471
        %v1707 = vmax.f32 %v1705, %v1474
        %v1708 = vmax.f32 %v1706, %v1476
        %v1709 = vmax.f32 %v1707, %v1708
        %v1710 = vrot.slane %v1709, 4
        %v1711 = vmax.f32 %v1709, %v1710
        %v1712 = vrot.slane %v1711, 2
        %v1713 = vmax.f32 %v1711, %v1712
        %v1714 = vrot.slane %v1713, 1
        %v1715 = vmax.f32 %v1713, %v1714
        %v1716 = vmax.f32 %v1488, %v1493
        %v1717 = vmax.f32 %v1490, %v1495
        %v1718 = vmax.f32 %v1716, %v1498
        %v1719 = vmax.f32 %v1717, %v1500
        %v1720 = vmax.f32 %v1718, %v1503
        %v1721 = vmax.f32 %v1719, %v1505
        %v1722 = vmax.f32 %v1720, %v1508
        %v1723 = vmax.f32 %v1721, %v1510
        %v1724 = vmax.f32 %v1722, %v1513
        %v1725 = vmax.f32 %v1723, %v1515
        %v1726 = vmax.f32 %v1724, %v1518
        %v1727 = vmax.f32 %v1725, %v1520
        %v1728 = vmax.f32 %v1726, %v1523
        %v1729 = vmax.f32 %v1727, %v1525
        %v1730 = vmax.f32 %v1728, %v1528
        %v1731 = vmax.f32 %v1729, %v1530
        %v1732 = vmax.f32 %v1730, %v1533
        %v1733 = vmax.f32 %v1731, %v1535
        %v1734 = vmax.f32 %v1732, %v1538
        %v1735 = vmax.f32 %v1733, %v1540
        %v1736 = vmax.f32 %v1734, %v1543
        %v1737 = vmax.f32 %v1735, %v1545
        %v1738 = vmax.f32 %v1736, %v1548
        %v1739 = vmax.f32 %v1737, %v1550
        %v1740 = vmax.f32 %v1738, %v1553
        %v1741 = vmax.f32 %v1739, %v1555
        %v1742 = vmax.f32 %v1740, %v1558
        %v1743 = vmax.f32 %v1741, %v1560
        %v1744 = vmax.f32 %v1742, %v1563
        %v1745 = vmax.f32 %v1743, %v1565
        %v1746 = vmax.f32 %v1744, %v1568
        %v1747 = vmax.f32 %v1745, %v1570
        %v1748 = vmax.f32 %v1746, %v1573
        %v1749 = vmax.f32 %v1747, %v1575
        %v1750 = vmax.f32 %v1748, %v1578
        %v1751 = vmax.f32 %v1749, %v1580
        %v1752 = vmax.f32 %v1750, %v1583
        %v1753 = vmax.f32 %v1751, %v1585
        %v1754 = vmax.f32 %v1752, %v1588
        %v1755 = vmax.f32 %v1753, %v1590
        %v1756 = vmax.f32 %v1754, %v1593
        %v1757 = vmax.f32 %v1755, %v1595
        %v1758 = vmax.f32 %v1756, %v1598
        %v1759 = vmax.f32 %v1757, %v1600
        %v1760 = vmax.f32 %v1758, %v1603
        %v1761 = vmax.f32 %v1759, %v1605
        %v1762 = vmax.f32 %v1760, %v1608
        %v1763 = vmax.f32 %v1761, %v1610
        %v1764 = vmax.f32 %v1762, %v1613
        %v1765 = vmax.f32 %v1763, %v1615
        %v1766 = vmax.f32 %v1764, %v1618
        %v1767 = vmax.f32 %v1765, %v1620
        %v1768 = vmax.f32 %v1766, %v1623
        %v1769 = vmax.f32 %v1767, %v1625
        %v1770 = vmax.f32 %v1768, %v1628
        %v1771 = vmax.f32 %v1769, %v1630
        %v1772 = vmax.f32 %v1770, %v1633
        %v1773 = vmax.f32 %v1771, %v1635
        %v1774 = vmax.f32 %v1772, %v1638
        %v1775 = vmax.f32 %v1773, %v1640
        %v1776 = vmax.f32 %v1774, %v1643
        %v1777 = vmax.f32 %v1775, %v1645
        %v1778 = vmax.f32 %v1776, %v1777
        %v1779 = vrot.slane %v1778, 4
        %v1780 = vmax.f32 %v1778, %v1779
        %v1781 = vrot.slane %v1780, 2
        %v1782 = vmax.f32 %v1780, %v1781
        %v1783 = vrot.slane %v1782, 1
        %v1784 = vmax.f32 %v1782, %v1783
        %v1785 = vsub.f32 %v1319, %v1715
        %v1786 = vsub.f32 %v1488, %v1784
        %v1787 = vsub.f32 %v1321, %v1715
        %v1788 = vsub.f32 %v1490, %v1784
        %v1789 = vsub.f32 %v1324, %v1715
        %v1790 = vsub.f32 %v1493, %v1784
        %v1791 = vsub.f32 %v1326, %v1715
        %v1792 = vsub.f32 %v1495, %v1784
        %v1793 = vsub.f32 %v1329, %v1715
        %v1794 = vsub.f32 %v1498, %v1784
        %v1795 = vsub.f32 %v1331, %v1715
        %v1796 = vsub.f32 %v1500, %v1784
        %v1797 = vsub.f32 %v1334, %v1715
        %v1798 = vsub.f32 %v1503, %v1784
        %v1799 = vsub.f32 %v1336, %v1715
        %v1800 = vsub.f32 %v1505, %v1784
        %v1801 = vsub.f32 %v1339, %v1715
        %v1802 = vsub.f32 %v1508, %v1784
        %v1803 = vsub.f32 %v1341, %v1715
        %v1804 = vsub.f32 %v1510, %v1784
        %v1805 = vsub.f32 %v1344, %v1715
        %v1806 = vsub.f32 %v1513, %v1784
        %v1807 = vsub.f32 %v1346, %v1715
        %v1808 = vsub.f32 %v1515, %v1784
        %v1809 = vsub.f32 %v1349, %v1715
        %v1810 = vsub.f32 %v1518, %v1784
        %v1811 = vsub.f32 %v1351, %v1715
        %v1812 = vsub.f32 %v1520, %v1784
        %v1813 = vsub.f32 %v1354, %v1715
        %v1814 = vsub.f32 %v1523, %v1784
        %v1815 = vsub.f32 %v1356, %v1715
        %v1816 = vsub.f32 %v1525, %v1784
        %v1817 = vsub.f32 %v1359, %v1715
        %v1818 = vsub.f32 %v1528, %v1784
        %v1819 = vsub.f32 %v1361, %v1715
        %v1820 = vsub.f32 %v1530, %v1784
        %v1821 = vsub.f32 %v1364, %v1715
        %v1822 = vsub.f32 %v1533, %v1784
        %v1823 = vsub.f32 %v1366, %v1715
        %v1824 = vsub.f32 %v1535, %v1784
        %v1825 = vsub.f32 %v1369, %v1715
        %v1826 = vsub.f32 %v1538, %v1784
        %v1827 = vsub.f32 %v1371, %v1715
        %v1828 = vsub.f32 %v1540, %v1784
        %v1829 = vsub.f32 %v1374, %v1715
        %v1830 = vsub.f32 %v1543, %v1784
        %v1831 = vsub.f32 %v1376, %v1715
        %v1832 = vsub.f32 %v1545, %v1784
        %v1833 = vsub.f32 %v1379, %v1715
        %v1834 = vsub.f32 %v1548, %v1784
        %v1835 = vsub.f32 %v1381, %v1715
        %v1836 = vsub.f32 %v1550, %v1784
        %v1837 = vsub.f32 %v1384, %v1715
        %v1838 = vsub.f32 %v1553, %v1784
        %v1839 = vsub.f32 %v1386, %v1715
        %v1840 = vsub.f32 %v1555, %v1784
        %v1841 = vsub.f32 %v1389, %v1715
        %v1842 = vsub.f32 %v1558, %v1784
        %v1843 = vsub.f32 %v1391, %v1715
        %v1844 = vsub.f32 %v1560, %v1784
        %v1845 = vsub.f32 %v1394, %v1715
        %v1846 = vsub.f32 %v1563, %v1784
        %v1847 = vsub.f32 %v1396, %v1715
        %v1848 = vsub.f32 %v1565, %v1784
        %v1849 = vsub.f32 %v1399, %v1715
        %v1850 = vsub.f32 %v1568, %v1784
        %v1851 = vsub.f32 %v1401, %v1715
        %v1852 = vsub.f32 %v1570, %v1784
        %v1853 = vsub.f32 %v1404, %v1715
        %v1854 = vsub.f32 %v1573, %v1784
        %v1855 = vsub.f32 %v1406, %v1715
        %v1856 = vsub.f32 %v1575, %v1784
        %v1857 = vsub.f32 %v1409, %v1715
        %v1858 = vsub.f32 %v1578, %v1784
        %v1859 = vsub.f32 %v1411, %v1715
        %v1860 = vsub.f32 %v1580, %v1784
        %v1861 = vsub.f32 %v1414, %v1715
        %v1862 = vsub.f32 %v1583, %v1784
        %v1863 = vsub.f32 %v1416, %v1715
        %v1864 = vsub.f32 %v1585, %v1784
        %v1865 = vsub.f32 %v1419, %v1715
        %v1866 = vsub.f32 %v1588, %v1784
        %v1867 = vsub.f32 %v1421, %v1715
        %v1868 = vsub.f32 %v1590, %v1784
        %v1869 = vsub.f32 %v1424, %v1715
        %v1870 = vsub.f32 %v1593, %v1784
        %v1871 = vsub.f32 %v1426, %v1715
        %v1872 = vsub.f32 %v1595, %v1784
        %v1873 = vsub.f32 %v1429, %v1715
        %v1874 = vsub.f32 %v1598, %v1784
        %v1875 = vsub.f32 %v1431, %v1715
        %v1876 = vsub.f32 %v1600, %v1784
        %v1877 = vsub.f32 %v1434, %v1715
        %v1878 = vsub.f32 %v1603, %v1784
        %v1879 = vsub.f32 %v1436, %v1715
        %v1880 = vsub.f32 %v1605, %v1784
        %v1881 = vsub.f32 %v1439, %v1715
        %v1882 = vsub.f32 %v1608, %v1784
        %v1883 = vsub.f32 %v1441, %v1715
        %v1884 = vsub.f32 %v1610, %v1784
        %v1885 = vsub.f32 %v1444, %v1715
        %v1886 = vsub.f32 %v1613, %v1784
        %v1887 = vsub.f32 %v1446, %v1715
        %v1888 = vsub.f32 %v1615, %v1784
        %v1889 = vsub.f32 %v1449, %v1715
        %v1890 = vsub.f32 %v1618, %v1784
        %v1891 = vsub.f32 %v1451, %v1715
        %v1892 = vsub.f32 %v1620, %v1784
        %v1893 = vsub.f32 %v1454, %v1715
        %v1894 = vsub.f32 %v1623, %v1784
        %v1895 = vsub.f32 %v1456, %v1715
        %v1896 = vsub.f32 %v1625, %v1784
        %v1897 = vsub.f32 %v1459, %v1715
        %v1898 = vsub.f32 %v1628, %v1784
        %v1899 = vsub.f32 %v1461, %v1715
        %v1900 = vsub.f32 %v1630, %v1784
        %v1901 = vsub.f32 %v1464, %v1715
        %v1902 = vsub.f32 %v1633, %v1784
        %v1903 = vsub.f32 %v1466, %v1715
        %v1904 = vsub.f32 %v1635, %v1784
        %v1905 = vsub.f32 %v1469, %v1715
        %v1906 = vsub.f32 %v1638, %v1784
        %v1907 = vsub.f32 %v1471, %v1715
        %v1908 = vsub.f32 %v1640, %v1784
        %v1909 = vsub.f32 %v1474, %v1715
        %v1910 = vsub.f32 %v1643, %v1784
        %v1911 = vsub.f32 %v1476, %v1715
        %v1912 = vsub.f32 %v1645, %v1784
        %v1913 = vmul.f32 %v1785, 1.442695
        %v1914 = vpow.pop %v1913
        %v1915 = vmul.f32 %v1786, 1.442695
        %v1916 = vpow.pop %v1915
        %v1917 = vmul.f32 %v1787, 1.442695
        %v1918 = vpow.pop %v1917
        %v1919 = vmul.f32 %v1788, 1.442695
        %v1920 = vpow.pop %v1919
        %v1921 = vmul.f32 %v1789, 1.442695
        %v1922 = vpow.pop %v1921
        %v1923 = vmul.f32 %v1790, 1.442695
        %v1924 = vpow.pop %v1923
        %v1925 = vmul.f32 %v1791, 1.442695
        %v1926 = vpow.pop %v1925
        %v1927 = vmul.f32 %v1792, 1.442695
        %v1928 = vpow.pop %v1927
        %v1929 = vmul.f32 %v1793, 1.442695
        %v1930 = vpow.pop %v1929
        %v1931 = vmul.f32 %v1794, 1.442695
        %v1932 = vpow.pop %v1931
        %v1933 = vmul.f32 %v1795, 1.442695
        %v1934 = vpow.pop %v1933
        %v1935 = vmul.f32 %v1796, 1.442695
        %v1936 = vpow.pop %v1935
        %v1937 = vmul.f32 %v1797, 1.442695
        %v1938 = vpow.pop %v1937
        %v1939 = vmul.f32 %v1798, 1.442695
        %v1940 = vpow.pop %v1939
        %v1941 = vmul.f32 %v1799, 1.442695
        %v1942 = vpow.pop %v1941
        %v1943 = vmul.f32 %v1800, 1.442695
        %v1944 = vpow.pop %v1943
        %v1945 = vmul.f32 %v1801, 1.442695
        %v1946 = vpow.pop %v1945
        %v1947 = vmul.f32 %v1802, 1.442695
        %v1948 = vpow.pop %v1947
        %v1949 = vmul.f32 %v1803, 1.442695
        %v1950 = vpow.pop %v1949
        %v1951 = vmul.f32 %v1804, 1.442695
        %v1952 = vpow.pop %v1951
        %v1953 = vmul.f32 %v1805, 1.442695
        %v1954 = vpow.pop %v1953
        %v1955 = vmul.f32 %v1806, 1.442695
        %v1956 = vpow.pop %v1955
        %v1957 = vmul.f32 %v1807, 1.442695
        %v1958 = vpow.pop %v1957
        %v1959 = vmul.f32 %v1808, 1.442695
        %v1960 = vpow.pop %v1959
        %v1961 = vmul.f32 %v1809, 1.442695
        %v1962 = vpow.pop %v1961
        %v1963 = vmul.f32 %v1810, 1.442695
        %v1964 = vpow.pop %v1963
        %v1965 = vmul.f32 %v1811, 1.442695
        %v1966 = vpow.pop %v1965
        %v1967 = vmul.f32 %v1812, 1.442695
        %v1968 = vpow.pop %v1967
        %v1969 = vmul.f32 %v1813, 1.442695
        %v1970 = vpow.pop %v1969
        %v1971 = vmul.f32 %v1814, 1.442695
        %v1972 = vpow.pop %v1971
        %v1973 = vmul.f32 %v1815, 1.442695
        %v1974 = vpow.pop %v1973
        %v1975 = vmul.f32 %v1816, 1.442695
        %v1976 = vpow.pop %v1975
        %v1977 = vmul.f32 %v1817, 1.442695
        %v1978 = vpow.pop %v1977
        %v1979 = vmul.f32 %v1818, 1.442695
        %v1980 = vpow.pop %v1979
        %v1981 = vmul.f32 %v1819, 1.442695
        %v1982 = vpow.pop %v1981
        %v1983 = vmul.f32 %v1820, 1.442695
        %v1984 = vpow.pop %v1983
        %v1985 = vmul.f32 %v1821, 1.442695
        %v1986 = vpow.pop %v1985
        %v1987 = vmul.f32 %v1822, 1.442695
        %v1988 = vpow.pop %v1987
        %v1989 = vmul.f32 %v1823, 1.442695
        %v1990 = vpow.pop %v1989
        %v1991 = vmul.f32 %v1824, 1.442695
        %v1992 = vpow.pop %v1991
        %v1993 = vmul.f32 %v1825, 1.442695
        %v1994 = vpow.pop %v1993
        %v1995 = vmul.f32 %v1826, 1.442695
        %v1996 = vpow.pop %v1995
        %v1997 = vmul.f32 %v1827, 1.442695
        %v1998 = vpow.pop %v1997
        %v1999 = vmul.f32 %v1828, 1.442695
        %v2000 = vpow.pop %v1999
        %v2001 = vmul.f32 %v1829, 1.442695
        %v2002 = vpow.pop %v2001
        %v2003 = vmul.f32 %v1830, 1.442695
        %v2004 = vpow.pop %v2003
        %v2005 = vmul.f32 %v1831, 1.442695
        %v2006 = vpow.pop %v2005
        %v2007 = vmul.f32 %v1832, 1.442695
        %v2008 = vpow.pop %v2007
        %v2009 = vmul.f32 %v1833, 1.442695
        %v2010 = vpow.pop %v2009
        %v2011 = vmul.f32 %v1834, 1.442695
        %v2012 = vpow.pop %v2011
        %v2013 = vmul.f32 %v1835, 1.442695
        %v2014 = vpow.pop %v2013
        %v2015 = vmul.f32 %v1836, 1.442695
        %v2016 = vpow.pop %v2015
        %v2017 = vmul.f32 %v1837, 1.442695
        %v2018 = vpow.pop %v2017
        %v2019 = vmul.f32 %v1838, 1.442695
        %v2020 = vpow.pop %v2019
        %v2021 = vmul.f32 %v1839, 1.442695
        %v2022 = vpow.pop %v2021
        %v2023 = vmul.f32 %v1840, 1.442695
        %v2024 = vpow.pop %v2023
        %v2025 = vmul.f32 %v1841, 1.442695
        %v2026 = vpow.pop %v2025
        %v2027 = vmul.f32 %v1842, 1.442695
        %v2028 = vpow.pop %v2027
        %v2029 = vmul.f32 %v1843, 1.442695
        %v2030 = vpow.pop %v2029
        %v2031 = vmul.f32 %v1844, 1.442695
        %v2032 = vpow.pop %v2031
        %v2033 = vmul.f32 %v1845, 1.442695
        %v2034 = vpow.pop %v2033
        %v2035 = vmul.f32 %v1846, 1.442695
        %v2036 = vpow.pop %v2035
        %v2037 = vmul.f32 %v1847, 1.442695
        %v2038 = vpow.pop %v2037
        %v2039 = vmul.f32 %v1848, 1.442695
        %v2040 = vpow.pop %v2039
        %v2041 = vmul.f32 %v1849, 1.442695
        %v2042 = vpow.pop %v2041
        %v2043 = vmul.f32 %v1850, 1.442695
        %v2044 = vpow.pop %v2043
        %v2045 = vmul.f32 %v1851, 1.442695
        %v2046 = vpow.pop %v2045
        %v2047 = vmul.f32 %v1852, 1.442695
        %v2048 = vpow.pop %v2047
        %v2049 = vmul.f32 %v1853, 1.442695
        %v2050 = vpow.pop %v2049
        %v2051 = vmul.f32 %v1854, 1.442695
        %v2052 = vpow.pop %v2051
        %v2053 = vmul.f32 %v1855, 1.442695
        %v2054 = vpow.pop %v2053
        %v2055 = vmul.f32 %v1856, 1.442695
        %v2056 = vpow.pop %v2055
        %v2057 = vmul.f32 %v1857, 1.442695
        %v2058 = vpow.pop %v2057
        %v2059 = vmul.f32 %v1858, 1.442695
        %v2060 = vpow.pop %v2059
        %v2061 = vmul.f32 %v1859, 1.442695
        %v2062 = vpow.pop %v2061
        %v2063 = vmul.f32 %v1860, 1.442695
        %v2064 = vpow.pop %v2063
        %v2065 = vmul.f32 %v1861, 1.442695
        %v2066 = vpow.pop %v2065
        %v2067 = vmul.f32 %v1862, 1.442695
        %v2068 = vpow.pop %v2067
        %v2069 = vmul.f32 %v1863, 1.442695
        %v2070 = vpow.pop %v2069
        %v2071 = vmul.f32 %v1864, 1.442695
        %v2072 = vpow.pop %v2071
        %v2073 = vmul.f32 %v1865, 1.442695
        %v2074 = vpow.pop %v2073
        %v2075 = vmul.f32 %v1866, 1.442695
        %v2076 = vpow.pop %v2075
        %v2077 = vmul.f32 %v1867, 1.442695
        %v2078 = vpow.pop %v2077
        %v2079 = vmul.f32 %v1868, 1.442695
        %v2080 = vpow.pop %v2079
        %v2081 = vmul.f32 %v1869, 1.442695
        %v2082 = vpow.pop %v2081
        %v2083 = vmul.f32 %v1870, 1.442695
        %v2084 = vpow.pop %v2083
        %v2085 = vmul.f32 %v1871, 1.442695
        %v2086 = vpow.pop %v2085
        %v2087 = vmul.f32 %v1872, 1.442695
        %v2088 = vpow.pop %v2087
        %v2089 = vmul.f32 %v1873, 1.442695
        %v2090 = vpow.pop %v2089
        %v2091 = vmul.f32 %v1874, 1.442695
        %v2092 = vpow.pop %v2091
        %v2093 = vmul.f32 %v1875, 1.442695
        %v2094 = vpow.pop %v2093
        %v2095 = vmul.f32 %v1876, 1.442695
        %v2096 = vpow.pop %v2095
        %v2097 = vmul.f32 %v1877, 1.442695
        %v2098 = vpow.pop %v2097
        %v2099 = vmul.f32 %v1878, 1.442695
        %v2100 = vpow.pop %v2099
        %v2101 = vmul.f32 %v1879, 1.442695
        %v2102 = vpow.pop %v2101
        %v2103 = vmul.f32 %v1880, 1.442695
        %v2104 = vpow.pop %v2103
        %v2105 = vmul.f32 %v1881, 1.442695
        %v2106 = vpow.pop %v2105
        %v2107 = vmul.f32 %v1882, 1.442695
        %v2108 = vpow.pop %v2107
        %v2109 = vmul.f32 %v1883, 1.442695
        %v2110 = vpow.pop %v2109
        %v2111 = vmul.f32 %v1884, 1.442695
        %v2112 = vpow.pop %v2111
        %v2113 = vmul.f32 %v1885, 1.442695
        %v2114 = vpow.pop %v2113
        %v2115 = vmul.f32 %v1886, 1.442695
        %v2116 = vpow.pop %v2115
        %v2117 = vmul.f32 %v1887, 1.442695
        %v2118 = vpow.pop %v2117
        %v2119 = vmul.f32 %v1888, 1.442695
        %v2120 = vpow.pop %v2119
        %v2121 = vmul.f32 %v1889, 1.442695
        %v2122 = vpow.pop %v2121
        %v2123 = vmul.f32 %v1890, 1.442695
        %v2124 = vpow.pop %v2123
        %v2125 = vmul.f32 %v1891, 1.442695
        %v2126 = vpow.pop %v2125
        %v2127 = vmul.f32 %v1892, 1.442695
        %v2128 = vpow.pop %v2127
        %v2129 = vmul.f32 %v1893, 1.442695
        %v2130 = vpow.pop %v2129
        %v2131 = vmul.f32 %v1894, 1.442695
        %v2132 = vpow.pop %v2131
        %v2133 = vmul.f32 %v1895, 1.442695
        %v2134 = vpow.pop %v2133
        %v2135 = vmul.f32 %v1896, 1.442695
        %v2136 = vpow.pop %v2135
        %v2137 = vmul.f32 %v1897, 1.442695
        %v2138 = vpow.pop %v2137
        %v2139 = vmul.f32 %v1898, 1.442695
        %v2140 = vpow.pop %v2139
        %v2141 = vmul.f32 %v1899, 1.442695
        %v2142 = vpow.pop %v2141
        %v2143 = vmul.f32 %v1900, 1.442695
        %v2144 = vpow.pop %v2143
        %v2145 = vmul.f32 %v1901, 1.442695
        %v2146 = vpow.pop %v2145
        %v2147 = vmul.f32 %v1902, 1.442695
        %v2148 = vpow.pop %v2147
        %v2149 = vmul.f32 %v1903, 1.442695
        %v2150 = vpow.pop %v2149
        %v2151 = vmul.f32 %v1904, 1.442695
        %v2152 = vpow.pop %v2151
        %v2153 = vmul.f32 %v1905, 1.442695
        %v2154 = vpow.pop %v2153
        %v2155 = vmul.f32 %v1906, 1.442695
        %v2156 = vpow.pop %v2155
        %v2157 = vmul.f32 %v1907, 1.442695
        %v2158 = vpow.pop %v2157
        %v2159 = vmul.f32 %v1908, 1.442695
        %v2160 = vpow.pop %v2159
        %v2161 = vmul.f32 %v1909, 1.442695
        %v2162 = vpow.pop %v2161
        %v2163 = vmul.f32 %v1910, 1.442695
        %v2164 = vpow.pop %v2163
        %v2165 = vmul.f32 %v1911, 1.442695
        %v2166 = vpow.pop %v2165
        %v2167 = vmul.f32 %v1912, 1.442695
        %v2168 = vpow.pop %v2167
        %v2169 = vadd.f32 %v1914, %v1918
        %v2170 = vadd.f32 %v2169, %v1922
        %v2171 = vadd.f32 %v2170, %v1926
        %v2172 = vadd.f32 %v2171, %v1930
        %v2173 = vadd.f32 %v2172, %v1934
        %v2174 = vadd.f32 %v2173, %v1938
        %v2175 = vadd.f32 %v2174, %v1942
        %v2176 = vadd.f32 %v2175, %v1946
        %v2177 = vadd.f32 %v2176, %v1950
        %v2178 = vadd.f32 %v2177, %v1954
        %v2179 = vadd.f32 %v2178, %v1958
        %v2180 = vadd.f32 %v2179, %v1962
        %v2181 = vadd.f32 %v2180, %v1966
        %v2182 = vadd.f32 %v2181, %v1970
        %v2183 = vadd.f32 %v2182, %v1974
        %v2184 = vadd.f32 %v2183, %v1978
        %v2185 = vadd.f32 %v2184, %v1982
        %v2186 = vadd.f32 %v2185, %v1986
        %v2187 = vadd.f32 %v2186, %v1990
        %v2188 = vadd.f32 %v2187, %v1994
        %v2189 = vadd.f32 %v2188, %v1998
        %v2190 = vadd.f32 %v2189, %v2002
        %v2191 = vadd.f32 %v2190, %v2006
        %v2192 = vadd.f32 %v2191, %v2010
        %v2193 = vadd.f32 %v2192, %v2014
        %v2194 = vadd.f32 %v2193, %v2018
        %v2195 = vadd.f32 %v2194, %v2022
        %v2196 = vadd.f32 %v2195, %v2026
        %v2197 = vadd.f32 %v2196, %v2030
        %v2198 = vadd.f32 %v2197, %v2034
        %v2199 = vadd.f32 %v2198, %v2038
        %v2200 = vadd.f32 %v2199, %v2042
        %v2201 = vadd.f32 %v2200, %v2046
        %v2202 = vadd.f32 %v2201, %v2050
        %v2203 = vadd.f32 %v2202, %v2054
        %v2204 = vadd.f32 %v2203, %v2058
        %v2205 = vadd.f32 %v2204, %v2062
        %v2206 = vadd.f32 %v2205, %v2066
        %v2207 = vadd.f32 %v2206, %v2070
        %v2208 = vadd.f32 %v2207, %v2074
        %v2209 = vadd.f32 %v2208, %v2078
        %v2210 = vadd.f32 %v2209, %v2082
        %v2211 = vadd.f32 %v2210, %v2086
        %v2212 = vadd.f32 %v2211, %v2090
        %v2213 = vadd.f32 %v2212, %v2094
        %v2214 = vadd.f32 %v2213, %v2098
        %v2215 = vadd.f32 %v2214, %v2102
        %v2216 = vadd.f32 %v2215, %v2106
        %v2217 = vadd.f32 %v2216, %v2110
        %v2218 = vadd.f32 %v2217, %v2114
        %v2219 = vadd.f32 %v2218, %v2118
        %v2220 = vadd.f32 %v2219, %v2122
        %v2221 = vadd.f32 %v2220, %v2126
        %v2222 = vadd.f32 %v2221, %v2130
        %v2223 = vadd.f32 %v2222, %v2134
        %v2224 = vadd.f32 %v2223, %v2138
        %v2225 = vadd.f32 %v2224, %v2142
        %v2226 = vadd.f32 %v2225, %v2146
        %v2227 = vadd.f32 %v2226, %v2150
        %v2228 = vadd.f32 %v2227, %v2154
        %v2229 = vadd.f32 %v2228, %v2158
        %v2230 = vadd.f32 %v2229, %v2162
        %v2231 = vadd.f32 %v2230, %v2166
        %v2232 = vrot.slane %v2231, 4
        %v2233 = vadd.f32 %v2231, %v2232
        %v2234 = vrot.slane %v2233, 2
        %v2235 = vadd.f32 %v2233, %v2234
        %v2236 = vrot.slane %v2235, 1
        %v2237 = vadd.f32 %v2235, %v2236
        %v2238 = vadd.f32 %v1916, %v1920
        %v2239 = vadd.f32 %v2238, %v1924
        %v2240 = vadd.f32 %v2239, %v1928
        %v2241 = vadd.f32 %v2240, %v1932
        %v2242 = vadd.f32 %v2241, %v1936
        %v2243 = vadd.f32 %v2242, %v1940
        %v2244 = vadd.f32 %v2243, %v1944
        %v2245 = vadd.f32 %v2244, %v1948
        %v2246 = vadd.f32 %v2245, %v1952
        %v2247 = vadd.f32 %v2246, %v1956
        %v2248 = vadd.f32 %v2247, %v1960
        %v2249 = vadd.f32 %v2248, %v1964
        %v2250 = vadd.f32 %v2249, %v1968
        %v2251 = vadd.f32 %v2250, %v1972
        %v2252 = vadd.f32 %v2251, %v1976
        %v2253 = vadd.f32 %v2252, %v1980
        %v2254 = vadd.f32 %v2253, %v1984
        %v2255 = vadd.f32 %v2254, %v1988
        %v2256 = vadd.f32 %v2255, %v1992
        %v2257 = vadd.f32 %v2256, %v1996
        %v2258 = vadd.f32 %v2257, %v2000
        %v2259 = vadd.f32 %v2258, %v2004
        %v2260 = vadd.f32 %v2259, %v2008
        %v2261 = vadd.f32 %v2260, %v2012
        %v2262 = vadd.f32 %v2261, %v2016
        %v2263 = vadd.f32 %v2262, %v2020
        %v2264 = vadd.f32 %v2263, %v2024
        %v2265 = vadd.f32 %v2264, %v2028
        %v2266 = vadd.f32 %v2265, %v2032
        %v2267 = vadd.f32 %v2266, %v2036
        %v2268 = vadd.f32 %v2267, %v2040
        %v2269 = vadd.f32 %v2268, %v2044
        %v2270 = vadd.f32 %v2269, %v2048
        %v2271 = vadd.f32 %v2270, %v2052
        %v2272 = vadd.f32 %v2271, %v2056
        %v2273 = vadd.f32 %v2272, %v2060
        %v2274 = vadd.f32 %v2273, %v2064
        %v2275 = vadd.f32 %v2274, %v2068
        %v2276 = vadd.f32 %v2275, %v2072
        %v2277 = vadd.f32 %v2276, %v2076
        %v2278 = vadd.f32 %v2277, %v2080
        %v2279 = vadd.f32 %v2278, %v2084
        %v2280 = vadd.f32 %v2279, %v2088
        %v2281 = vadd.f32 %v2280, %v2092
        %v2282 = vadd.f32 %v2281, %v2096
        %v2283 = vadd.f32 %v2282, %v2100
        %v2284 = vadd.f32 %v2283, %v2104
        %v2285 = vadd.f32 %v2284, %v2108
        %v2286 = vadd.f32 %v2285, %v2112
        %v2287 = vadd.f32 %v2286, %v2116
        %v2288 = vadd.f32 %v2287, %v2120
        %v2289 = vadd.f32 %v2288, %v2124
        %v2290 = vadd.f32 %v2289, %v2128
        %v2291 = vadd.f32 %v2290, %v2132
        %v2292 = vadd.f32 %v2291, %v2136
        %v2293 = vadd.f32 %v2292, %v2140
        %v2294 = vadd.f32 %v2293, %v2144
        %v2295 = vadd.f32 %v2294, %v2148
        %v2296 = vadd.f32 %v2295, %v2152
        %v2297 = vadd.f32 %v2296, %v2156
        %v2298 = vadd.f32 %v2297, %v2160
        %v2299 = vadd.f32 %v2298, %v2164
        %v2300 = vadd.f32 %v2299, %v2168
        %v2301 = vrot.slane %v2300, 4
        %v2302 = vadd.f32 %v2300, %v2301
        %v2303 = vrot.slane %v2302, 2
        %v2304 = vadd.f32 %v2302, %v2303
        %v2305 = vrot.slane %v2304, 1
        %v2306 = vadd.f32 %v2304, %v2305
        %v2307 = vld [vmem:[#allocation4] sm:$0xff]
        %v2308 = vld [vmem:[#allocation4 + $0x8] sm:$0xff]
        %v2309 = vld [vmem:[#allocation4 + $0x10] sm:$0xff]
        %v2310 = vld [vmem:[#allocation4 + $0x18] sm:$0xff]
        %v2311 = vld [vmem:[#allocation4 + $0x20] sm:$0xff]
        %v2312 = vld [vmem:[#allocation4 + $0x28] sm:$0xff]
        %v2313 = vld [vmem:[#allocation4 + $0x30] sm:$0xff]
        %v2314 = vld [vmem:[#allocation4 + $0x38] sm:$0xff]
        %v2315 = vpack.c.bf16 %v1918, %v1914
        %v2316 = vpack.c.bf16 %v1920, %v1916
        %v2317 = vpack.c.bf16 %v1926, %v1922
        %v2318 = vpack.c.bf16 %v1928, %v1924
        %v2319 = vpack.c.bf16 %v1934, %v1930
        %v2320 = vpack.c.bf16 %v1936, %v1932
        %v2321 = vpack.c.bf16 %v1942, %v1938
        %v2322 = vpack.c.bf16 %v1944, %v1940
        %v2323 = vpack.c.bf16 %v1950, %v1946
        %v2324 = vpack.c.bf16 %v1952, %v1948
        %v2325 = vpack.c.bf16 %v1958, %v1954
        %v2326 = vpack.c.bf16 %v1960, %v1956
        %v2327 = vpack.c.bf16 %v1966, %v1962
        %v2328 = vpack.c.bf16 %v1968, %v1964
        %v2329 = vpack.c.bf16 %v1974, %v1970
        %v2330 = vpack.c.bf16 %v1976, %v1972
        %v2331 = vpack.c.bf16 %v1982, %v1978
        %v2332 = vpack.c.bf16 %v1984, %v1980
        %v2333 = vpack.c.bf16 %v1990, %v1986
        %v2334 = vpack.c.bf16 %v1992, %v1988
        %v2335 = vpack.c.bf16 %v1998, %v1994
        %v2336 = vpack.c.bf16 %v2000, %v1996
        %v2337 = vpack.c.bf16 %v2006, %v2002
        %v2338 = vpack.c.bf16 %v2008, %v2004
        %v2339 = vpack.c.bf16 %v2014, %v2010
        %v2340 = vpack.c.bf16 %v2016, %v2012
        %v2341 = vpack.c.bf16 %v2022, %v2018
        %v2342 = vpack.c.bf16 %v2024, %v2020
        %v2343 = vpack.c.bf16 %v2030, %v2026
        %v2344 = vpack.c.bf16 %v2032, %v2028
        %v2345 = vpack.c.bf16 %v2038, %v2034
        %v2346 = vpack.c.bf16 %v2040, %v2036
        %v2347 = vpack.c.bf16 %v2046, %v2042
        %v2348 = vpack.c.bf16 %v2048, %v2044
        %v2349 = vpack.c.bf16 %v2054, %v2050
        %v2350 = vpack.c.bf16 %v2056, %v2052
        %v2351 = vpack.c.bf16 %v2062, %v2058
        %v2352 = vpack.c.bf16 %v2064, %v2060
        %v2353 = vpack.c.bf16 %v2070, %v2066
        %v2354 = vpack.c.bf16 %v2072, %v2068
        %v2355 = vpack.c.bf16 %v2078, %v2074
        %v2356 = vpack.c.bf16 %v2080, %v2076
        %v2357 = vpack.c.bf16 %v2086, %v2082
        %v2358 = vpack.c.bf16 %v2088, %v2084
        %v2359 = vpack.c.bf16 %v2094, %v2090
        %v2360 = vpack.c.bf16 %v2096, %v2092
        %v2361 = vpack.c.bf16 %v2102, %v2098
        %v2362 = vpack.c.bf16 %v2104, %v2100
        %v2363 = vpack.c.bf16 %v2110, %v2106
        %v2364 = vpack.c.bf16 %v2112, %v2108
        %v2365 = vpack.c.bf16 %v2118, %v2114
        %v2366 = vpack.c.bf16 %v2120, %v2116
        %v2367 = vpack.c.bf16 %v2126, %v2122
        %v2368 = vpack.c.bf16 %v2128, %v2124
        %v2369 = vpack.c.bf16 %v2134, %v2130
        %v2370 = vpack.c.bf16 %v2136, %v2132
        %v2371 = vpack.c.bf16 %v2142, %v2138
        %v2372 = vpack.c.bf16 %v2144, %v2140
        %v2373 = vpack.c.bf16 %v2150, %v2146
        %v2374 = vpack.c.bf16 %v2152, %v2148
        %v2375 = vpack.c.bf16 %v2158, %v2154
        %v2376 = vpack.c.bf16 %v2160, %v2156
        %v2377 = vpack.c.bf16 %v2166, %v2162
        %v2378 = vpack.c.bf16 %v2168, %v2164
        %v2387 = vunpack.c.l.b16 %v2307
        %v2388 = vunpack.c.h.b16 %v2307
        %v2389 = vunpack.c.l.b16 %v2308
        %v2390 = vunpack.c.h.b16 %v2308
        %v2391 = vunpack.c.l.b16 %v2309
        %v2392 = vunpack.c.h.b16 %v2309
        %v2393 = vunpack.c.l.b16 %v2310
        %v2394 = vunpack.c.h.b16 %v2310
        %v2395 = vunpack.c.l.b16 %v2311
        %v2396 = vunpack.c.h.b16 %v2311
        %v2397 = vunpack.c.l.b16 %v2312
        %v2398 = vunpack.c.h.b16 %v2312
        %v2399 = vunpack.c.l.b16 %v2313
        %v2400 = vunpack.c.h.b16 %v2313
        %v2401 = vunpack.c.l.b16 %v2314
        %v2402 = vunpack.c.h.b16 %v2314
        %v2403 = vpack.c.b16 %v2391, %v2387
        %v2404 = vpack.c.b16 %v2392, %v2388
        %v2405 = vpack.c.b16 %v2393, %v2389
        %v2406 = vpack.c.b16 %v2394, %v2390
        %v2407 = vpack.c.b16 %v2399, %v2395
        %v2408 = vpack.c.b16 %v2400, %v2396
        %v2409 = vpack.c.b16 %v2401, %v2397
        %v2410 = vpack.c.b16 %v2402, %v2398
        %2419 = vmatpush.bf16.msra.mxu0 %v2329
        %2420 = vmatpush.bf16.msra.mxu0 %v2327
        %2421 = vmatpush.bf16.msra.mxu0 %v2325
        %2422 = vmatpush.bf16.msra.mxu0 %v2323
        %2423 = vmatpush.bf16.msra.mxu0 %v2321
        %2424 = vmatpush.bf16.msra.mxu0 %v2319
        %2425 = vmatpush.bf16.msra.mxu0 %v2317
        %2426 = vmatpush.bf16.msra.mxu0 %v2315
        %2427 = vmatmul.bf16.gmra.mxu0 %v2403
        %v2428 = vpop.f32.mrf.mxu0
        %v2429 = vadd.f32 0.0, %v2428
        %v2430 = vpop.f32.mrf.mxu0
        %v2431 = vadd.f32 0.0, %v2430
        %2432 = vmatmul.bf16.gmra.mxu0 %v2407
        %v2433 = vpop.f32.mrf.mxu0
        %v2434 = vadd.f32 0.0, %v2433
        %v2435 = vpop.f32.mrf.mxu0
        %v2436 = vadd.f32 0.0, %v2435
        %2437 = vdwg.mxu0
        %2438 = vmatpush.bf16.msra.mxu0 %v2345
        %2439 = vmatpush.bf16.msra.mxu0 %v2343
        %2440 = vmatpush.bf16.msra.mxu0 %v2341
        %2441 = vmatpush.bf16.msra.mxu0 %v2339
        %2442 = vmatpush.bf16.msra.mxu0 %v2337
        %2443 = vmatpush.bf16.msra.mxu0 %v2335
        %2444 = vmatpush.bf16.msra.mxu0 %v2333
        %2445 = vmatpush.bf16.msra.mxu0 %v2331
        %2446 = vmatmul.bf16.gmra.mxu0 %v2404
        %v2447 = vpop.f32.mrf.mxu0
        %v2448 = vadd.f32 %v2429, %v2447
        %v2449 = vpop.f32.mrf.mxu0
        %v2450 = vadd.f32 %v2431, %v2449
        %2451 = vmatmul.bf16.gmra.mxu0 %v2408
        %v2452 = vpop.f32.mrf.mxu0
        %v2453 = vadd.f32 %v2434, %v2452
        %v2454 = vpop.f32.mrf.mxu0
        %v2455 = vadd.f32 %v2436, %v2454
        %2456 = vdwg.mxu0
        %2457 = vmatpush.bf16.msra.mxu0 %v2361
        %2458 = vmatpush.bf16.msra.mxu0 %v2359
        %2459 = vmatpush.bf16.msra.mxu0 %v2357
        %2460 = vmatpush.bf16.msra.mxu0 %v2355
        %2461 = vmatpush.bf16.msra.mxu0 %v2353
        %2462 = vmatpush.bf16.msra.mxu0 %v2351
        %2463 = vmatpush.bf16.msra.mxu0 %v2349
        %2464 = vmatpush.bf16.msra.mxu0 %v2347
        %2465 = vmatmul.bf16.gmra.mxu0 %v2405
        %v2466 = vpop.f32.mrf.mxu0
        %v2467 = vadd.f32 %v2448, %v2466
        %v2468 = vpop.f32.mrf.mxu0
        %v2469 = vadd.f32 %v2450, %v2468
        %2470 = vmatmul.bf16.gmra.mxu0 %v2409
        %v2471 = vpop.f32.mrf.mxu0
        %v2472 = vadd.f32 %v2453, %v2471
        %v2473 = vpop.f32.mrf.mxu0
        %v2474 = vadd.f32 %v2455, %v2473
        %2475 = vdwg.mxu0
        %2476 = vmatpush.bf16.msra.mxu0 %v2377
        %2477 = vmatpush.bf16.msra.mxu0 %v2375
        %2478 = vmatpush.bf16.msra.mxu0 %v2373
        %2479 = vmatpush.bf16.msra.mxu0 %v2371
        %2480 = vmatpush.bf16.msra.mxu0 %v2369
        %2481 = vmatpush.bf16.msra.mxu0 %v2367
        %2482 = vmatpush.bf16.msra.mxu0 %v2365
        %2483 = vmatpush.bf16.msra.mxu0 %v2363
        %2484 = vmatmul.bf16.gmra.mxu0 %v2406
        %v2485 = vpop.f32.mrf.mxu0
        %v2486 = vadd.f32 %v2467, %v2485
        %v2487 = vpop.f32.mrf.mxu0
        %v2488 = vadd.f32 %v2469, %v2487
        %2489 = vmatmul.bf16.gmra.mxu0 %v2410
        %v2490 = vpop.f32.mrf.mxu0
        %v2491 = vadd.f32 %v2472, %v2490
        %v2492 = vpop.f32.mrf.mxu0
        %v2493 = vadd.f32 %v2474, %v2492
        %2494 = vdwg.mxu0
        %2495 = vmatpush.bf16.msra.mxu0 %v2330
        %2496 = vmatpush.bf16.msra.mxu0 %v2328
        %2497 = vmatpush.bf16.msra.mxu0 %v2326
        %2498 = vmatpush.bf16.msra.mxu0 %v2324
        %2499 = vmatpush.bf16.msra.mxu0 %v2322
        %2500 = vmatpush.bf16.msra.mxu0 %v2320
        %2501 = vmatpush.bf16.msra.mxu0 %v2318
        %2502 = vmatpush.bf16.msra.mxu0 %v2316
        %2503 = vmatmul.bf16.gmra.mxu0 %v2403
        %v2504 = vpop.f32.mrf.mxu0
        %v2505 = vadd.f32 0.0, %v2504
        %v2506 = vpop.f32.mrf.mxu0
        %v2507 = vadd.f32 0.0, %v2506
        %2508 = vmatmul.bf16.gmra.mxu0 %v2407
        %v2509 = vpop.f32.mrf.mxu0
        %v2510 = vadd.f32 0.0, %v2509
        %v2511 = vpop.f32.mrf.mxu0
        %v2512 = vadd.f32 0.0, %v2511
        %2513 = vdwg.mxu0
        %2514 = vmatpush.bf16.msra.mxu0 %v2346
        %2515 = vmatpush.bf16.msra.mxu0 %v2344
        %2516 = vmatpush.bf16.msra.mxu0 %v2342
        %2517 = vmatpush.bf16.msra.mxu0 %v2340
        %2518 = vmatpush.bf16.msra.mxu0 %v2338
        %2519 = vmatpush.bf16.msra.mxu0 %v2336
        %2520 = vmatpush.bf16.msra.mxu0 %v2334
        %2521 = vmatpush.bf16.msra.mxu0 %v2332
        %2522 = vmatmul.bf16.gmra.mxu0 %v2404
        %v2523 = vpop.f32.mrf.mxu0
        %v2524 = vadd.f32 %v2505, %v2523
        %v2525 = vpop.f32.mrf.mxu0
        %v2526 = vadd.f32 %v2507, %v2525
        %2527 = vmatmul.bf16.gmra.mxu0 %v2408
        %v2528 = vpop.f32.mrf.mxu0
        %v2529 = vadd.f32 %v2510, %v2528
        %v2530 = vpop.f32.mrf.mxu0
        %v2531 = vadd.f32 %v2512, %v2530
        %2532 = vdwg.mxu0
        %2533 = vmatpush.bf16.msra.mxu0 %v2362
        %2534 = vmatpush.bf16.msra.mxu0 %v2360
        %2535 = vmatpush.bf16.msra.mxu0 %v2358
        %2536 = vmatpush.bf16.msra.mxu0 %v2356
        %2537 = vmatpush.bf16.msra.mxu0 %v2354
        %2538 = vmatpush.bf16.msra.mxu0 %v2352
        %2539 = vmatpush.bf16.msra.mxu0 %v2350
        %2540 = vmatpush.bf16.msra.mxu0 %v2348
        %2541 = vmatmul.bf16.gmra.mxu0 %v2405
        %v2542 = vpop.f32.mrf.mxu0
        %v2543 = vadd.f32 %v2524, %v2542
        %v2544 = vpop.f32.mrf.mxu0
        %v2545 = vadd.f32 %v2526, %v2544
        %2546 = vmatmul.bf16.gmra.mxu0 %v2409
        %v2547 = vpop.f32.mrf.mxu0
        %v2548 = vadd.f32 %v2529, %v2547
        %v2549 = vpop.f32.mrf.mxu0
        %v2550 = vadd.f32 %v2531, %v2549
        %2551 = vdwg.mxu0
        %2552 = vmatpush.bf16.msra.mxu0 %v2378
        %2553 = vmatpush.bf16.msra.mxu0 %v2376
        %2554 = vmatpush.bf16.msra.mxu0 %v2374
        %2555 = vmatpush.bf16.msra.mxu0 %v2372
        %2556 = vmatpush.bf16.msra.mxu0 %v2370
        %2557 = vmatpush.bf16.msra.mxu0 %v2368
        %2558 = vmatpush.bf16.msra.mxu0 %v2366
        %2559 = vmatpush.bf16.msra.mxu0 %v2364
        %2560 = vmatmul.bf16.gmra.mxu0 %v2406
        %v2561 = vpop.f32.mrf.mxu0
        %v2562 = vadd.f32 %v2543, %v2561
        %v2563 = vpop.f32.mrf.mxu0
        %v2564 = vadd.f32 %v2545, %v2563
        %2565 = vmatmul.bf16.gmra.mxu0 %v2410
        %v2566 = vpop.f32.mrf.mxu0
        %v2567 = vadd.f32 %v2548, %v2566
        %v2568 = vpop.f32.mrf.mxu0
        %v2569 = vadd.f32 %v2550, %v2568
        %2570 = vdwg.mxu0
        %v2571 = vrcp.pop %v2237
        %v2572 = vrcp.pop %v2306
        %v2573 = vmul.f32 %v2486, %v2571
        %v2574 = vmul.f32 %v2562, %v2572
        %v2575 = vmul.f32 %v2488, %v2571
        %v2576 = vmul.f32 %v2564, %v2572
        %v2577 = vmul.f32 %v2491, %v2571
        %v2578 = vmul.f32 %v2567, %v2572
        %v2579 = vmul.f32 %v2493, %v2571
        %v2580 = vmul.f32 %v2569, %v2572
        %s2581 = sld [smem:[#allocation6]]
        %v2582 = vstv %s2581
        %v2583 = vmul.f32 %v2582, %v2573
        %v2584 = vmul.f32 %v2582, %v2574
        %v2585 = vmul.f32 %v2582, %v2575
        %v2586 = vmul.f32 %v2582, %v2576
        %v2587 = vmul.f32 %v2582, %v2577
        %v2588 = vmul.f32 %v2582, %v2578
        %v2589 = vmul.f32 %v2582, %v2579
        %v2590 = vmul.f32 %v2582, %v2580
        %v2591 = vadd.f32 %v2583, %v930
        %v2592 = vadd.f32 %v2584, %v931
        %v2593 = vadd.f32 %v2585, %v932
        %v2594 = vadd.f32 %v2586, %v933
        %v2595 = vadd.f32 %v2587, %v934
        %v2596 = vadd.f32 %v2588, %v935
        %v2597 = vadd.f32 %v2589, %v936
        %v2598 = vadd.f32 %v2590, %v937
        %2599 = vst [vmem:[%s283] sm:$0xff] %v2591
        %2600 = vst [vmem:[%s283 + $0x8] sm:$0xff] %v2592
        %2601 = vst [vmem:[%s283 + $0x10] sm:$0xff] %v2593
        %2602 = vst [vmem:[%s283 + $0x18] sm:$0xff] %v2594
        %2603 = vst [vmem:[%s283 + $0x20] sm:$0xff] %v2595
        %2604 = vst [vmem:[%s283 + $0x28] sm:$0xff] %v2596
        %2605 = vst [vmem:[%s283 + $0x30] sm:$0xff] %v2597
        %2606 = vst [vmem:[%s283 + $0x38] sm:$0xff] %v2598
        %s2607 = sand.u32 %s203, 1
        %s2608 = scalar_lea.sflag [#allocation8], %s2607
        %s2609 = sand.u32 %s203, 1
        %s2610 = smul.addr %s2609, 64
        %s2611 = scalar_lea.vmem [#allocation7], %s2610
        // Predicated region
        $region57: #{tpu_custom_call.1} parent=47 // pred_check
          %p2612 = pneg %p213
        $region58: #{tpu_custom_call.1} parent=47 // pred_check_branch
          %2614 = sbr.rel (%p2612) target = $region60
        $region59: #{tpu_custom_call.1} parent=47 // pred_region
          %s2615 = smul.u32 %s29, 2
          %s2616 = sadd.s32 %s2615, %s30
          %s2617 = smul.u32 2, %s2616
          %2619 = vsyncadd %s2608, 0
          %s2620 = smul.addr %s28, 16
          %s2621 = sadd.s32 %s2617, %s2620
          %s2622 = smul.addr %s2621, 8
          %s2623 = scalar_lea.hbm %s8, %s2622
          %s2624 = sshll.u32 %s2611, 4
          %s2625 = int_to_ptr.vmem [resolvable:$true] %s2624
          %s2626 = sshll.u32 %s2623, 4
          %s2627 = int_to_ptr.hbm [resolvable:$true] %s2626
          %2632 = dma.vmem_to_hbm [thread:$0]  %s2625, 1024, %s2627, %s2608, 256, 512, 16
        $region60: #{tpu_custom_call.1} parent=47 // pred_fallthru
          _
      $region48: #{tpu_custom_call.1} parent=5 // pred_fallthru
        _
      %p2633 = scmp.le.s32.totalorder 2, %s18
      // Predicated region
      $region61: #{tpu_custom_call.1} parent=5 // pred_check
        %p2634 = pneg %p2633
      $region62: #{tpu_custom_call.1} parent=5 // pred_check_branch
        %2636 = sbr.rel (%p2634) target = $region64
      $region63: #{tpu_custom_call.1} parent=5 // pred_region
        %s2637 = ssub.s32 %s18, 2
        // Predicated region
        $region65: #{tpu_custom_call.1} parent=63 // pred_check
          %p2638 = pneg %p219
        $region66: #{tpu_custom_call.1} parent=63 // pred_check_branch
          %2640 = sbr.rel (%p2638) target = $region68
        $region67: #{tpu_custom_call.1} parent=63 // pred_region
          %s2641 = sand.u32 %s204, 1
          %s2642 = scalar_lea.sflag [#allocation8], %s2641
          %s2643 = sand.u32 %s204, 1
          %s2644 = smul.addr %s2643, 64
          %s2645 = scalar_lea.vmem [#allocation7], %s2644
          %2647 = dma.done %s2642, 1024
        $region68: #{tpu_custom_call.1} parent=63 // pred_fallthru
          _
      $region64: #{tpu_custom_call.1} parent=5 // pred_fallthru
        _
    $region6: #{tpu_custom_call.1} parent=1 // loop_footer
      %s22 = sadd.s32 1, %s18
    $region7: #{tpu_custom_call.1} parent=1 // loop_footer_branch
      %17 = sbr.rel target = $region3
    $region8: #{tpu_custom_call.1} parent=1 // loop_exit
      _
    %2648 = vsyncpa [#allocation8], 1
    %s2649 = scalar_lea.sflag [#allocation8], 1
    %2650 = vsyncpa %s2649, 1
  %2651 = vsyncmov [#allocation5]
  %s2652 = vpop.sfrf %2651
  %p2653 = scmp.eq.s32.totalorder %s2652, 0
  %p2654 = pneg %p2653
  %2656 = shalt.err (%p2654)

</llo_original>
